<compile_context>
chip_gen: v6e
topology: v6e:2x2x1
jax: 0.10.0
libtpu: 0.0.40
codegen_flags: <defaults>
</compile_context>

<pallas_src>
import functools
import math

import jax
import jax.numpy as jnp
from jax.experimental import pallas as pl
from jax.experimental.pallas import tpu as pltpu


def encoder_layer_kernel(x_ref,       # (Nb, L, E)   batch-major activation block
                         wqkv_ref,    # (E, 3E)      in_proj_weight^T (Q cols pre-scaled)
                         bqkv_ref,    # (1, 3E)      in_proj_bias (Q part pre-scaled), f32
                         wo_ref,      # (E, E)       out_proj.weight^T
                         w1_ref,      # (E, F)       ffn.w_1.weight^T
                         b1_ref,      # (1, F)       f32
                         w2_ref,      # (F, E)       ffn.w_2.weight^T
                         rows_ref,    # (6, E)       [out_b, ln1_g, ln1_b, ffn_b2, ln2_g, ln2_b]
                         out_ref,     # (Nb, L, E)
                         attn_ref=None,   # (Nb, L, L) present only when need_weights
                         *, n_head, matmul_dtype):
    Nb, L, E = x_ref.shape
    H = n_head
    dh = E // H
    mm = lambda a: a.astype(matmul_dtype)      # matmul-operand cast (bf16 in production)

    rows = rows_ref[...]                        # (6, E) f32
    bo, g1, be1, b2, g2, be2 = (rows[i:i + 1, :] for i in range(6))

    x = x_ref[...]                              # (Nb, L, E) f32
    xf = x.reshape(Nb * L, E)                   # row-wise ops are row-order agnostic

    # --- single full-width QKV projection: (Nb*L, E) @ (E, 3E) ---------------
    qkv = jnp.dot(mm(xf), wqkv_ref[...],
                  preferred_element_type=jnp.float32) + bqkv_ref[...]   # (Nb*L, 3E) f32
    qkv3 = qkv.reshape(Nb, L, 3 * E)            # leading-dim split only

    # --- attention: per-head lane slices, batched over the Nb sequences ------
    # (only the inherently per-head score / PV matmuls live in this loop; all
    #  weight matmuls stay as single full-width MXU passes)
    ctx_heads = []
    p_sum = jnp.zeros((Nb, L, L), jnp.float32) if attn_ref is not None else None
    for h in range(H):
        q_h = qkv3[:, :, h * dh:(h + 1) * dh]                      # (Nb, L, dh), pre-scaled
        k_h = qkv3[:, :, E + h * dh:E + (h + 1) * dh]
        v_h = qkv3[:, :, 2 * E + h * dh:2 * E + (h + 1) * dh]
        s = jnp.einsum('bid,bjd->bij', mm(q_h), mm(k_h),
                       preferred_element_type=jnp.float32)          # (Nb, L, L) f32
        s = s - jnp.max(s, axis=-1, keepdims=True)
        e = jnp.exp(s)
        # TODO(synk): approx=True (pure EUP vrcp) in production; exact kept so the
        # 1e-4 reference check below holds.
        p = e * pl.reciprocal(jnp.sum(e, axis=-1, keepdims=True), approx=False)
        if p_sum is not None:
            p_sum = p_sum + p
        ctx_heads.append(jnp.einsum('bij,bjd->bid', mm(p), mm(v_h),
                                    preferred_element_type=jnp.float32))  # (Nb, L, dh)

    if attn_ref is not None:
        # nn.MultiheadAttention returns head-averaged attention weights
        attn_ref[...] = p_sum * (1.0 / H)

    # --- merge heads (lane concat) -> ONE (Nb*L, E) @ (E, E) out-projection ---
    ctx = jnp.concatenate(ctx_heads, axis=-1).reshape(Nb * L, E)
    attn_out = jnp.dot(mm(ctx), wo_ref[...],
                       preferred_element_type=jnp.float32) + bo

    # --- residual + LayerNorm (eps=1e-6), statistics in f32 -------------------
    h1 = xf + attn_out
    mu = jnp.mean(h1, axis=-1, keepdims=True)
    var = jnp.mean((h1 - mu) ** 2, axis=-1, keepdims=True)
    h1 = (h1 - mu) * jax.lax.rsqrt(var + 1e-6) * g1 + be1

    # --- PositionWiseFeedForward: Linear -> ReLU -> Linear -> +res -> LN ------
    f = jnp.dot(mm(h1), w1_ref[...], preferred_element_type=jnp.float32) + b1_ref[...]
    f = jnp.maximum(f, 0.0)
    f = jnp.dot(mm(f), w2_ref[...], preferred_element_type=jnp.float32) + b2
    y = f + h1
    mu2 = jnp.mean(y, axis=-1, keepdims=True)
    var2 = jnp.mean((y - mu2) ** 2, axis=-1, keepdims=True)
    y = (y - mu2) * jax.lax.rsqrt(var2 + 1e-6) * g2 + be2

    out_ref[...] = y.reshape(Nb, L, E).astype(out_ref.dtype)


@functools.partial(jax.jit,
                   static_argnames=("n_head", "batch_block", "need_weights", "matmul_dtype"))
def encoder_layer(enc_input, params, *, n_head, batch_block=None, need_weights=True,
                  matmul_dtype=jnp.float32):
    """enc_input: (L, N, E) seq-first, as in PyTorch nn.MultiheadAttention."""
    L, N, E = enc_input.shape
    (wqkv, bqkv, wo, bo, g1, be1, w1, b1, w2, b2, g2, be2) = params
    H = n_head
    if E % H:
        raise ValueError("d_model must be divisible by n_head")
    dh = E // H
    F = w1.shape[0]
    scale = 1.0 / math.sqrt(dh)

    Nb = N if batch_block is None else batch_block
    if N % Nb:
        raise ValueError("batch_block must divide the batch size")

    f32 = lambda a: a.astype(jnp.float32)
    wdt = lambda a: a.astype(matmul_dtype)

    # One-time weight restructuring (runs fused inside this jit; with static
    # weights it can be hoisted/precomputed once at load time).
    # 1/sqrt(dh) is folded into the Q columns of W_qkv^T and the Q part of the bias.
    qkv_scale = jnp.concatenate([jnp.full((E,), scale, jnp.float32),
                                 jnp.ones((2 * E,), jnp.float32)])
    w_qkv_t = wdt(f32(wqkv).T * qkv_scale)                 # (E, 3E)
    b_qkv = (f32(bqkv) * qkv_scale).reshape(1, 3 * E)      # (1, 3E) f32
    wo_t = wdt(f32(wo).T)                                  # (E, E)
    w1_t = wdt(f32(w1).T)                                  # (E, F)
    w2_t = wdt(f32(w2).T)                                  # (F, E)
    b1_r = f32(b1).reshape(1, F)
    rows = jnp.stack([f32(bo), f32(g1), f32(be1), f32(b2), f32(g2), f32(be2)], axis=0)  # (6, E)

    # TODO(synk): these two activation transposes are 2 extra HBM round trips; at
    # production they can be dropped by blocking the seq-first tensor directly
    # ((L, Nb, E) blocks) at the price of an in-kernel (l,n)->(n,l) relayout for
    # the attention stage.  The batch-major path below is the known-safe lowering.
    x = jnp.transpose(f32(enc_input), (1, 0, 2))           # (N, L, E)

    weights = (w_qkv_t, b_qkv, wo_t, w1_t, b1_r, w2_t, rows)
    full = lambda a: pl.BlockSpec(a.shape, lambda b: (0,) * a.ndim)

    out_shape = [jax.ShapeDtypeStruct((N, L, E), jnp.float32)]
    out_specs = [pl.BlockSpec((Nb, L, E), lambda b: (b, 0, 0))]
    if need_weights:
        out_shape.append(jax.ShapeDtypeStruct((N, L, L), jnp.float32))
        out_specs.append(pl.BlockSpec((Nb, L, L), lambda b: (b, 0, 0)))

    results = pl.pallas_call(
        functools.partial(encoder_layer_kernel, n_head=n_head, matmul_dtype=matmul_dtype),
        out_shape=tuple(out_shape),
        grid=(N // Nb,),
        in_specs=[pl.BlockSpec((Nb, L, E), lambda b: (b, 0, 0))]
                 + [full(a) for a in weights],
        out_specs=tuple(out_specs),
        compiler_params=pltpu.CompilerParams(
            dimension_semantics=("parallel",),        # v7x: shard batch steps over 2 TCs
            vmem_limit_bytes=48 * 1024 * 1024,        # raise v5e's 16 MiB scoped default
        ),
    )(x, *weights)

    enc_output = jnp.transpose(results[0], (1, 0, 2))      # back to (L, N, E)
    enc_attn = results[1] if need_weights else None
    return enc_output, enc_attn


def reference(enc_input, params, *, n_head):
    (wqkv, bqkv, wo, bo, g1, be1, w1, b1, w2, b2, g2, be2) = params
    L, N, E = enc_input.shape
    dh = E // n_head
    x = jnp.transpose(enc_input, (1, 0, 2))                        # (N, L, E)
    qkv = jnp.einsum('nle,fe->nlf', x, wqkv) + bqkv
    q, k, v = qkv[..., :E] / math.sqrt(dh), qkv[..., E:2 * E], qkv[..., 2 * E:]
    qh = q.reshape(N, L, n_head, dh); kh = k.reshape(N, L, n_head, dh); vh = v.reshape(N, L, n_head, dh)
    s = jnp.einsum('nlhd,nmhd->nhlm', qh, kh)
    p = jax.nn.softmax(s, axis=-1)
    ctx = jnp.einsum('nhlm,nmhd->nlhd', p, vh).reshape(N, L, E)
    ao = jnp.einsum('nle,fe->nlf', ctx, wo) + bo
    def ln(z, g, be):
        mu = z.mean(-1, keepdims=True); var = ((z - mu) ** 2).mean(-1, keepdims=True)
        return (z - mu) / jnp.sqrt(var + 1e-6) * g + be
    h1 = ln(x + ao, g1, be1)
    f = jnp.maximum(jnp.einsum('nle,fe->nlf', h1, w1) + b1, 0.0)
    f = jnp.einsum('nlf,ef->nle', f, w2) + b2
    y = ln(f + h1, g2, be2)
    return jnp.transpose(y, (1, 0, 2)), p.mean(axis=1)


if __name__ == "__main__":
    # EncoderLayer(d_model=32, d_inner=64, n_head=4, d_k=8, d_v=8)
    d_model, d_inner, n_head = 32, 64, 4
    L, N = 8, 2

    key = jax.random.PRNGKey(0)
    ks = jax.random.split(key, 9)
    sc = 0.1
    params = (
        sc * jax.random.normal(ks[0], (3 * d_model, d_model), jnp.float32),  # in_proj_weight
        sc * jax.random.normal(ks[1], (3 * d_model,), jnp.float32),          # in_proj_bias
        sc * jax.random.normal(ks[2], (d_model, d_model), jnp.float32),      # out_proj.weight
        sc * jax.random.normal(ks[3], (d_model,), jnp.float32),              # out_proj.bias
        jnp.ones((d_model,), jnp.float32),                                   # norm.weight
        jnp.zeros((d_model,), jnp.float32),                                  # norm.bias
        sc * jax.random.normal(ks[4], (d_inner, d_model), jnp.float32),      # ffn.w_1.weight
        sc * jax.random.normal(ks[5], (d_inner,), jnp.float32),              # ffn.w_1.bias
        sc * jax.random.normal(ks[6], (d_model, d_inner), jnp.float32),      # ffn.w_2.weight
        sc * jax.random.normal(ks[7], (d_model,), jnp.float32),              # ffn.w_2.bias
        jnp.ones((d_model,), jnp.float32),                                   # ffn layer_norm.weight
        jnp.zeros((d_model,), jnp.float32),                                  # ffn layer_norm.bias
    )

    enc_input = jax.random.normal(ks[8], (L, N, d_model), jnp.float32)       # (seq, batch, d_model)

    enc_out, enc_attn = encoder_layer(enc_input, params, n_head=n_head)
    jax.block_until_ready((enc_out, enc_attn))

    ref_out, ref_attn = reference(enc_input, params, n_head=n_head)
    assert jnp.allclose(enc_out, ref_out, atol=1e-4, rtol=1e-4)
    assert jnp.allclose(enc_attn, ref_attn, atol=1e-4, rtol=1e-4)

    # Exercise the cheaper no-attention-weights path (skips the (N,L,L) writeback).
    enc_out2, no_attn = encoder_layer(enc_input, params, n_head=n_head, need_weights=False)
    jax.block_until_ready(enc_out2)
    assert no_attn is None
    assert jnp.allclose(enc_out2, ref_out, atol=1e-4, rtol=1e-4)

    print("KERNEL_OK")
</pallas_src>

<mosaic_0001>
module attributes {stable_mosaic.version = 11 : i64} {
  func.func @encoder_layer_kernel(%arg0: i32, %arg1: memref<2x8x32xf32, #tpu.memory_space<vmem>>, %arg2: memref<32x96xf32, #tpu.memory_space<vmem>>, %arg3: memref<1x96xf32, #tpu.memory_space<vmem>>, %arg4: memref<32x32xf32, #tpu.memory_space<vmem>>, %arg5: memref<32x64xf32, #tpu.memory_space<vmem>>, %arg6: memref<1x64xf32, #tpu.memory_space<vmem>>, %arg7: memref<64x32xf32, #tpu.memory_space<vmem>>, %arg8: memref<6x32xf32, #tpu.memory_space<vmem>>, %arg9: memref<2x8x32xf32, #tpu.memory_space<vmem>>, %arg10: memref<2x8x8xf32, #tpu.memory_space<vmem>>) attributes {dimension_semantics = [#tpu.dimension_semantics<parallel>], iteration_bounds = array<i64: 1>, scalar_prefetch = 0 : i64, scratch_operands = 0 : i64, tpu.core_type = #tpu.core_type<tc>, window_params = [{transform_indices = @transform_0, window_bounds = array<i64: 2, 8, 32>}, {pipeline_mode = #tpu.pipeline_mode<synchronous>, transform_indices = @transform_1, window_bounds = array<i64: 32, 96>}, {pipeline_mode = #tpu.pipeline_mode<synchronous>, transform_indices = @transform_2, window_bounds = array<i64: 1, 96>}, {pipeline_mode = #tpu.pipeline_mode<synchronous>, transform_indices = @transform_3, window_bounds = array<i64: 32, 32>}, {pipeline_mode = #tpu.pipeline_mode<synchronous>, transform_indices = @transform_4, window_bounds = array<i64: 32, 64>}, {pipeline_mode = #tpu.pipeline_mode<synchronous>, transform_indices = @transform_5, window_bounds = array<i64: 1, 64>}, {pipeline_mode = #tpu.pipeline_mode<synchronous>, transform_indices = @transform_6, window_bounds = array<i64: 64, 32>}, {pipeline_mode = #tpu.pipeline_mode<synchronous>, transform_indices = @transform_7, window_bounds = array<i64: 6, 32>}, {transform_indices = @transform_8, window_bounds = array<i64: 2, 8, 32>}, {transform_indices = @transform_9, window_bounds = array<i64: 2, 8, 8>}]} {
    %c0 = arith.constant 0 : index
    %c0_0 = arith.constant 0 : index
    %0 = vector.load %arg8[%c0, %c0_0] : memref<6x32xf32, #tpu.memory_space<vmem>>, vector<6x32xf32>
    %1 = vector.extract_strided_slice %0 {offsets = [0, 0], sizes = [1, 32], strides = [1, 1]} : vector<6x32xf32> to vector<1x32xf32>
    %2 = vector.extract_strided_slice %0 {offsets = [1, 0], sizes = [1, 32], strides = [1, 1]} : vector<6x32xf32> to vector<1x32xf32>
    %3 = vector.extract_strided_slice %0 {offsets = [2, 0], sizes = [1, 32], strides = [1, 1]} : vector<6x32xf32> to vector<1x32xf32>
    %4 = vector.extract_strided_slice %0 {offsets = [3, 0], sizes = [1, 32], strides = [1, 1]} : vector<6x32xf32> to vector<1x32xf32>
    %5 = vector.extract_strided_slice %0 {offsets = [4, 0], sizes = [1, 32], strides = [1, 1]} : vector<6x32xf32> to vector<1x32xf32>
    %6 = vector.extract_strided_slice %0 {offsets = [5, 0], sizes = [1, 32], strides = [1, 1]} : vector<6x32xf32> to vector<1x32xf32>
    %c0_1 = arith.constant 0 : index
    %c0_2 = arith.constant 0 : index
    %c0_3 = arith.constant 0 : index
    %7 = vector.load %arg1[%c0_1, %c0_2, %c0_3] : memref<2x8x32xf32, #tpu.memory_space<vmem>>, vector<2x8x32xf32>
    %8 = vector.shape_cast %7 : vector<2x8x32xf32> to vector<16x32xf32>
    %c0_4 = arith.constant 0 : index
    %c0_5 = arith.constant 0 : index
    %9 = vector.load %arg2[%c0_4, %c0_5] : memref<32x96xf32, #tpu.memory_space<vmem>>, vector<32x96xf32>
    %cst = arith.constant dense<0.000000e+00> : vector<16x96xf32>
    %10 = tpu.matmul %8, %9, %cst {dimension_numbers = #tpu.dot_dimension_numbers<[1], [0], [0], [1], [0, 0, 1, 1], [], []>} : vector<16x32xf32>, vector<32x96xf32>, vector<16x96xf32> -> vector<16x96xf32>
    %c0_6 = arith.constant 0 : index
    %c0_7 = arith.constant 0 : index
    %11 = vector.load %arg3[%c0_6, %c0_7] : memref<1x96xf32, #tpu.memory_space<vmem>>, vector<1x96xf32>
    %12 = vector.broadcast %11 : vector<1x96xf32> to vector<16x96xf32>
    %13 = arith.addf %10, %12 : vector<16x96xf32>
    %14 = vector.shape_cast %13 : vector<16x96xf32> to vector<2x8x96xf32>
    %cst_8 = arith.constant 0.000000e+00 : f32
    %15 = vector.broadcast %cst_8 : f32 to vector<2x8x8xf32>
    %16 = vector.extract_strided_slice %14 {offsets = [0, 0, 0], sizes = [2, 8, 8], strides = [1, 1, 1]} : vector<2x8x96xf32> to vector<2x8x8xf32>
    %17 = vector.extract_strided_slice %14 {offsets = [0, 0, 32], sizes = [2, 8, 8], strides = [1, 1, 1]} : vector<2x8x96xf32> to vector<2x8x8xf32>
    %18 = vector.extract_strided_slice %14 {offsets = [0, 0, 64], sizes = [2, 8, 8], strides = [1, 1, 1]} : vector<2x8x96xf32> to vector<2x8x8xf32>
    "tpu.trace_start"() <{level = 10 : i32, message = "bid,bjd->bij"}> : () -> ()
    %cst_9 = arith.constant dense<0.000000e+00> : vector<2x8x8xf32>
    %19 = tpu.matmul %16, %17, %cst_9 {dimension_numbers = #tpu.dot_dimension_numbers<[2], [2], [1], [1], [0, 0, 0, 1, 1, 1], [0], [0]>} : vector<2x8x8xf32>, vector<2x8x8xf32>, vector<2x8x8xf32> -> vector<2x8x8xf32>
    "tpu.trace_stop"() : () -> ()
    %cst_10 = arith.constant dense<0xFF800000> : vector<2x8xf32>
    %20 = vector.multi_reduction <maximumf>, %19, %cst_10 [2] : vector<2x8x8xf32> to vector<2x8xf32>
    %21 = vector.shape_cast %20 : vector<2x8xf32> to vector<2x8x1xf32>
    %22 = vector.broadcast %21 : vector<2x8x1xf32> to vector<2x8x8xf32>
    %23 = arith.subf %19, %22 : vector<2x8x8xf32>
    %24 = math.exp %23 : vector<2x8x8xf32>
    %cst_11 = arith.constant dense<0.000000e+00> : vector<2x8xf32>
    %25 = vector.multi_reduction <add>, %24, %cst_11 [2] : vector<2x8x8xf32> to vector<2x8xf32>
    %26 = vector.shape_cast %25 : vector<2x8xf32> to vector<2x8x1xf32>
    %27 = tpu.reciprocal %26 : vector<2x8x1xf32> -> vector<2x8x1xf32>
    %28 = vector.broadcast %27 : vector<2x8x1xf32> to vector<2x8x8xf32>
    %29 = arith.mulf %24, %28 : vector<2x8x8xf32>
    %30 = arith.addf %15, %29 : vector<2x8x8xf32>
    "tpu.trace_start"() <{level = 10 : i32, message = "bij,bjd->bid"}> : () -> ()
    %cst_12 = arith.constant dense<0.000000e+00> : vector<2x8x8xf32>
    %31 = tpu.matmul %29, %18, %cst_12 {dimension_numbers = #tpu.dot_dimension_numbers<[2], [1], [1], [2], [0, 0, 0, 1, 1, 2], [0], [0]>} : vector<2x8x8xf32>, vector<2x8x8xf32>, vector<2x8x8xf32> -> vector<2x8x8xf32>
    "tpu.trace_stop"() : () -> ()
    %32 = vector.extract_strided_slice %14 {offsets = [0, 0, 8], sizes = [2, 8, 8], strides = [1, 1, 1]} : vector<2x8x96xf32> to vector<2x8x8xf32>
    %33 = vector.extract_strided_slice %14 {offsets = [0, 0, 40], sizes = [2, 8, 8], strides = [1, 1, 1]} : vector<2x8x96xf32> to vector<2x8x8xf32>
    %34 = vector.extract_strided_slice %14 {offsets = [0, 0, 72], sizes = [2, 8, 8], strides = [1, 1, 1]} : vector<2x8x96xf32> to vector<2x8x8xf32>
    "tpu.trace_start"() <{level = 10 : i32, message = "bid,bjd->bij"}> : () -> ()
    %cst_13 = arith.constant dense<0.000000e+00> : vector<2x8x8xf32>
    %35 = tpu.matmul %32, %33, %cst_13 {dimension_numbers = #tpu.dot_dimension_numbers<[2], [2], [1], [1], [0, 0, 0, 1, 1, 1], [0], [0]>} : vector<2x8x8xf32>, vector<2x8x8xf32>, vector<2x8x8xf32> -> vector<2x8x8xf32>
    "tpu.trace_stop"() : () -> ()
    %cst_14 = arith.constant dense<0xFF800000> : vector<2x8xf32>
    %36 = vector.multi_reduction <maximumf>, %35, %cst_14 [2] : vector<2x8x8xf32> to vector<2x8xf32>
    %37 = vector.shape_cast %36 : vector<2x8xf32> to vector<2x8x1xf32>
    %38 = vector.broadcast %37 : vector<2x8x1xf32> to vector<2x8x8xf32>
    %39 = arith.subf %35, %38 : vector<2x8x8xf32>
    %40 = math.exp %39 : vector<2x8x8xf32>
    %cst_15 = arith.constant dense<0.000000e+00> : vector<2x8xf32>
    %41 = vector.multi_reduction <add>, %40, %cst_15 [2] : vector<2x8x8xf32> to vector<2x8xf32>
    %42 = vector.shape_cast %41 : vector<2x8xf32> to vector<2x8x1xf32>
    %43 = tpu.reciprocal %42 : vector<2x8x1xf32> -> vector<2x8x1xf32>
    %44 = vector.broadcast %43 : vector<2x8x1xf32> to vector<2x8x8xf32>
    %45 = arith.mulf %40, %44 : vector<2x8x8xf32>
    %46 = arith.addf %30, %45 : vector<2x8x8xf32>
    "tpu.trace_start"() <{level = 10 : i32, message = "bij,bjd->bid"}> : () -> ()
    %cst_16 = arith.constant dense<0.000000e+00> : vector<2x8x8xf32>
    %47 = tpu.matmul %45, %34, %cst_16 {dimension_numbers = #tpu.dot_dimension_numbers<[2], [1], [1], [2], [0, 0, 0, 1, 1, 2], [0], [0]>} : vector<2x8x8xf32>, vector<2x8x8xf32>, vector<2x8x8xf32> -> vector<2x8x8xf32>
    "tpu.trace_stop"() : () -> ()
    %48 = vector.extract_strided_slice %14 {offsets = [0, 0, 16], sizes = [2, 8, 8], strides = [1, 1, 1]} : vector<2x8x96xf32> to vector<2x8x8xf32>
    %49 = vector.extract_strided_slice %14 {offsets = [0, 0, 48], sizes = [2, 8, 8], strides = [1, 1, 1]} : vector<2x8x96xf32> to vector<2x8x8xf32>
    %50 = vector.extract_strided_slice %14 {offsets = [0, 0, 80], sizes = [2, 8, 8], strides = [1, 1, 1]} : vector<2x8x96xf32> to vector<2x8x8xf32>
    "tpu.trace_start"() <{level = 10 : i32, message = "bid,bjd->bij"}> : () -> ()
    %cst_17 = arith.constant dense<0.000000e+00> : vector<2x8x8xf32>
    %51 = tpu.matmul %48, %49, %cst_17 {dimension_numbers = #tpu.dot_dimension_numbers<[2], [2], [1], [1], [0, 0, 0, 1, 1, 1], [0], [0]>} : vector<2x8x8xf32>, vector<2x8x8xf32>, vector<2x8x8xf32> -> vector<2x8x8xf32>
    "tpu.trace_stop"() : () -> ()
    %cst_18 = arith.constant dense<0xFF800000> : vector<2x8xf32>
    %52 = vector.multi_reduction <maximumf>, %51, %cst_18 [2] : vector<2x8x8xf32> to vector<2x8xf32>
    %53 = vector.shape_cast %52 : vector<2x8xf32> to vector<2x8x1xf32>
    %54 = vector.broadcast %53 : vector<2x8x1xf32> to vector<2x8x8xf32>
    %55 = arith.subf %51, %54 : vector<2x8x8xf32>
    %56 = math.exp %55 : vector<2x8x8xf32>
    %cst_19 = arith.constant dense<0.000000e+00> : vector<2x8xf32>
    %57 = vector.multi_reduction <add>, %56, %cst_19 [2] : vector<2x8x8xf32> to vector<2x8xf32>
    %58 = vector.shape_cast %57 : vector<2x8xf32> to vector<2x8x1xf32>
    %59 = tpu.reciprocal %58 : vector<2x8x1xf32> -> vector<2x8x1xf32>
    %60 = vector.broadcast %59 : vector<2x8x1xf32> to vector<2x8x8xf32>
    %61 = arith.mulf %56, %60 : vector<2x8x8xf32>
    %62 = arith.addf %46, %61 : vector<2x8x8xf32>
    "tpu.trace_start"() <{level = 10 : i32, message = "bij,bjd->bid"}> : () -> ()
    %cst_20 = arith.constant dense<0.000000e+00> : vector<2x8x8xf32>
    %63 = tpu.matmul %61, %50, %cst_20 {dimension_numbers = #tpu.dot_dimension_numbers<[2], [1], [1], [2], [0, 0, 0, 1, 1, 2], [0], [0]>} : vector<2x8x8xf32>, vector<2x8x8xf32>, vector<2x8x8xf32> -> vector<2x8x8xf32>
    "tpu.trace_stop"() : () -> ()
    %64 = vector.extract_strided_slice %14 {offsets = [0, 0, 24], sizes = [2, 8, 8], strides = [1, 1, 1]} : vector<2x8x96xf32> to vector<2x8x8xf32>
    %65 = vector.extract_strided_slice %14 {offsets = [0, 0, 56], sizes = [2, 8, 8], strides = [1, 1, 1]} : vector<2x8x96xf32> to vector<2x8x8xf32>
    %66 = vector.extract_strided_slice %14 {offsets = [0, 0, 88], sizes = [2, 8, 8], strides = [1, 1, 1]} : vector<2x8x96xf32> to vector<2x8x8xf32>
    "tpu.trace_start"() <{level = 10 : i32, message = "bid,bjd->bij"}> : () -> ()
    %cst_21 = arith.constant dense<0.000000e+00> : vector<2x8x8xf32>
    %67 = tpu.matmul %64, %65, %cst_21 {dimension_numbers = #tpu.dot_dimension_numbers<[2], [2], [1], [1], [0, 0, 0, 1, 1, 1], [0], [0]>} : vector<2x8x8xf32>, vector<2x8x8xf32>, vector<2x8x8xf32> -> vector<2x8x8xf32>
    "tpu.trace_stop"() : () -> ()
    %cst_22 = arith.constant dense<0xFF800000> : vector<2x8xf32>
    %68 = vector.multi_reduction <maximumf>, %67, %cst_22 [2] : vector<2x8x8xf32> to vector<2x8xf32>
    %69 = vector.shape_cast %68 : vector<2x8xf32> to vector<2x8x1xf32>
    %70 = vector.broadcast %69 : vector<2x8x1xf32> to vector<2x8x8xf32>
    %71 = arith.subf %67, %70 : vector<2x8x8xf32>
    %72 = math.exp %71 : vector<2x8x8xf32>
    %cst_23 = arith.constant dense<0.000000e+00> : vector<2x8xf32>
    %73 = vector.multi_reduction <add>, %72, %cst_23 [2] : vector<2x8x8xf32> to vector<2x8xf32>
    %74 = vector.shape_cast %73 : vector<2x8xf32> to vector<2x8x1xf32>
    %75 = tpu.reciprocal %74 : vector<2x8x1xf32> -> vector<2x8x1xf32>
    %76 = vector.broadcast %75 : vector<2x8x1xf32> to vector<2x8x8xf32>
    %77 = arith.mulf %72, %76 : vector<2x8x8xf32>
    %78 = arith.addf %62, %77 : vector<2x8x8xf32>
    "tpu.trace_start"() <{level = 10 : i32, message = "bij,bjd->bid"}> : () -> ()
    %cst_24 = arith.constant dense<0.000000e+00> : vector<2x8x8xf32>
    %79 = tpu.matmul %77, %66, %cst_24 {dimension_numbers = #tpu.dot_dimension_numbers<[2], [1], [1], [2], [0, 0, 0, 1, 1, 2], [0], [0]>} : vector<2x8x8xf32>, vector<2x8x8xf32>, vector<2x8x8xf32> -> vector<2x8x8xf32>
    "tpu.trace_stop"() : () -> ()
    %cst_25 = arith.constant 2.500000e-01 : f32
    %80 = vector.broadcast %cst_25 : f32 to vector<2x8x8xf32>
    %81 = arith.mulf %78, %80 : vector<2x8x8xf32>
    %c0_26 = arith.constant 0 : index
    %c0_27 = arith.constant 0 : index
    %c0_28 = arith.constant 0 : index
    %82 = vector.load %arg10[%c0_26, %c0_27, %c0_28] : memref<2x8x8xf32, #tpu.memory_space<vmem>>, vector<2x8x8xf32>
    tpu.vector_store %arg10[%c0_26, %c0_27, %c0_28], %81 {strides = array<i32>} : memref<2x8x8xf32, #tpu.memory_space<vmem>>, vector<2x8x8xf32>,
    %83 = tpu.concatenate %31, %47, %63, %79 in 2 : vector<2x8x8xf32>, vector<2x8x8xf32>, vector<2x8x8xf32>, vector<2x8x8xf32> -> vector<2x8x32xf32>
    %84 = vector.shape_cast %83 : vector<2x8x32xf32> to vector<16x32xf32>
    %c0_29 = arith.constant 0 : index
    %c0_30 = arith.constant 0 : index
    %85 = vector.load %arg4[%c0_29, %c0_30] : memref<32x32xf32, #tpu.memory_space<vmem>>, vector<32x32xf32>
    %cst_31 = arith.constant dense<0.000000e+00> : vector<16x32xf32>
    %86 = tpu.matmul %84, %85, %cst_31 {dimension_numbers = #tpu.dot_dimension_numbers<[1], [0], [0], [1], [0, 0, 1, 1], [], []>} : vector<16x32xf32>, vector<32x32xf32>, vector<16x32xf32> -> vector<16x32xf32>
    %87 = vector.broadcast %1 : vector<1x32xf32> to vector<16x32xf32>
    %88 = arith.addf %86, %87 : vector<16x32xf32>
    %89 = arith.addf %8, %88 : vector<16x32xf32>
    %cst_32 = arith.constant dense<0.000000e+00> : vector<16xf32>
    %90 = vector.multi_reduction <add>, %89, %cst_32 [1] : vector<16x32xf32> to vector<16xf32>
    %91 = vector.shape_cast %90 : vector<16xf32> to vector<16x1xf32>
    %cst_33 = arith.constant 3.200000e+01 : f32
    %92 = vector.broadcast %cst_33 : f32 to vector<16x1xf32>
    %93 = arith.divf %91, %92 : vector<16x1xf32>
    %94 = vector.broadcast %93 : vector<16x1xf32> to vector<16x32xf32>
    %95 = arith.subf %89, %94 : vector<16x32xf32>
    %96 = arith.mulf %95, %95 : vector<16x32xf32>
    %cst_34 = arith.constant dense<0.000000e+00> : vector<16xf32>
    %97 = vector.multi_reduction <add>, %96, %cst_34 [1] : vector<16x32xf32> to vector<16xf32>
    %98 = vector.shape_cast %97 : vector<16xf32> to vector<16x1xf32>
    %cst_35 = arith.constant 3.200000e+01 : f32
    %99 = vector.broadcast %cst_35 : f32 to vector<16x1xf32>
    %100 = arith.divf %98, %99 : vector<16x1xf32>
    %101 = vector.broadcast %93 : vector<16x1xf32> to vector<16x32xf32>
    %102 = arith.subf %89, %101 : vector<16x32xf32>
    %cst_36 = arith.constant 9.99999997E-7 : f32
    %103 = vector.broadcast %cst_36 : f32 to vector<16x1xf32>
    %104 = arith.addf %100, %103 : vector<16x1xf32>
    %105 = math.rsqrt %104 : vector<16x1xf32>
    %106 = vector.broadcast %105 : vector<16x1xf32> to vector<16x32xf32>
    %107 = arith.mulf %102, %106 : vector<16x32xf32>
    %108 = vector.broadcast %2 : vector<1x32xf32> to vector<16x32xf32>
    %109 = arith.mulf %107, %108 : vector<16x32xf32>
    %110 = vector.broadcast %3 : vector<1x32xf32> to vector<16x32xf32>
    %111 = arith.addf %109, %110 : vector<16x32xf32>
    %c0_37 = arith.constant 0 : index
    %c0_38 = arith.constant 0 : index
    %112 = vector.load %arg5[%c0_37, %c0_38] : memref<32x64xf32, #tpu.memory_space<vmem>>, vector<32x64xf32>
    %cst_39 = arith.constant dense<0.000000e+00> : vector<16x64xf32>
    %113 = tpu.matmul %111, %112, %cst_39 {dimension_numbers = #tpu.dot_dimension_numbers<[1], [0], [0], [1], [0, 0, 1, 1], [], []>} : vector<16x32xf32>, vector<32x64xf32>, vector<16x64xf32> -> vector<16x64xf32>
    %c0_40 = arith.constant 0 : index
    %c0_41 = arith.constant 0 : index
    %114 = vector.load %arg6[%c0_40, %c0_41] : memref<1x64xf32, #tpu.memory_space<vmem>>, vector<1x64xf32>
    %115 = vector.broadcast %114 : vector<1x64xf32> to vector<16x64xf32>
    %116 = arith.addf %113, %115 : vector<16x64xf32>
    %cst_42 = arith.constant 0.000000e+00 : f32
    %117 = vector.broadcast %cst_42 : f32 to vector<16x64xf32>
    %118 = arith.maximumf %116, %117 : vector<16x64xf32>
    %c0_43 = arith.constant 0 : index
    %c0_44 = arith.constant 0 : index
    %119 = vector.load %arg7[%c0_43, %c0_44] : memref<64x32xf32, #tpu.memory_space<vmem>>, vector<64x32xf32>
    %cst_45 = arith.constant dense<0.000000e+00> : vector<16x32xf32>
    %120 = tpu.matmul %118, %119, %cst_45 {dimension_numbers = #tpu.dot_dimension_numbers<[1], [0], [0], [1], [0, 0, 1, 1], [], []>} : vector<16x64xf32>, vector<64x32xf32>, vector<16x32xf32> -> vector<16x32xf32>
    %121 = vector.broadcast %4 : vector<1x32xf32> to vector<16x32xf32>
    %122 = arith.addf %120, %121 : vector<16x32xf32>
    %123 = arith.addf %122, %111 : vector<16x32xf32>
    %cst_46 = arith.constant dense<0.000000e+00> : vector<16xf32>
    %124 = vector.multi_reduction <add>, %123, %cst_46 [1] : vector<16x32xf32> to vector<16xf32>
    %125 = vector.shape_cast %124 : vector<16xf32> to vector<16x1xf32>
    %cst_47 = arith.constant 3.200000e+01 : f32
    %126 = vector.broadcast %cst_47 : f32 to vector<16x1xf32>
    %127 = arith.divf %125, %126 : vector<16x1xf32>
    %128 = vector.broadcast %127 : vector<16x1xf32> to vector<16x32xf32>
    %129 = arith.subf %123, %128 : vector<16x32xf32>
    %130 = arith.mulf %129, %129 : vector<16x32xf32>
    %cst_48 = arith.constant dense<0.000000e+00> : vector<16xf32>
    %131 = vector.multi_reduction <add>, %130, %cst_48 [1] : vector<16x32xf32> to vector<16xf32>
    %132 = vector.shape_cast %131 : vector<16xf32> to vector<16x1xf32>
    %cst_49 = arith.constant 3.200000e+01 : f32
    %133 = vector.broadcast %cst_49 : f32 to vector<16x1xf32>
    %134 = arith.divf %132, %133 : vector<16x1xf32>
    %135 = vector.broadcast %127 : vector<16x1xf32> to vector<16x32xf32>
    %136 = arith.subf %123, %135 : vector<16x32xf32>
    %cst_50 = arith.constant 9.99999997E-7 : f32
    %137 = vector.broadcast %cst_50 : f32 to vector<16x1xf32>
    %138 = arith.addf %134, %137 : vector<16x1xf32>
    %139 = math.rsqrt %138 : vector<16x1xf32>
    %140 = vector.broadcast %139 : vector<16x1xf32> to vector<16x32xf32>
    %141 = arith.mulf %136, %140 : vector<16x32xf32>
    %142 = vector.broadcast %5 : vector<1x32xf32> to vector<16x32xf32>
    %143 = arith.mulf %141, %142 : vector<16x32xf32>
    %144 = vector.broadcast %6 : vector<1x32xf32> to vector<16x32xf32>
    %145 = arith.addf %143, %144 : vector<16x32xf32>
    %146 = vector.shape_cast %145 : vector<16x32xf32> to vector<2x8x32xf32>
    %c0_51 = arith.constant 0 : index
    %c0_52 = arith.constant 0 : index
    %c0_53 = arith.constant 0 : index
    %147 = vector.load %arg9[%c0_51, %c0_52, %c0_53] : memref<2x8x32xf32, #tpu.memory_space<vmem>>, vector<2x8x32xf32>
    tpu.vector_store %arg9[%c0_51, %c0_52, %c0_53], %146 {strides = array<i32>} : memref<2x8x32xf32, #tpu.memory_space<vmem>>, vector<2x8x32xf32>,
    return
  }
  func.func @transform_0(%arg0: i32) -> (i32, i32, i32) {
    %c0_i32 = arith.constant 0 : i32
    %c0_i32_0 = arith.constant 0 : i32
    %c0_i32_1 = arith.constant 0 : i32
    return %arg0, %c0_i32, %c0_i32_0 : i32, i32, i32
  }
  func.func @transform_1(%arg0: i32) -> (i32, i32) {
    %c0_i32 = arith.constant 0 : i32
    %c0_i32_0 = arith.constant 0 : i32
    %c0_i32_1 = arith.constant 0 : i32
    return %c0_i32, %c0_i32_0 : i32, i32
  }
  func.func @transform_2(%arg0: i32) -> (i32, i32) {
    %c0_i32 = arith.constant 0 : i32
    %c0_i32_0 = arith.constant 0 : i32
    %c0_i32_1 = arith.constant 0 : i32
    return %c0_i32, %c0_i32_0 : i32, i32
  }
  func.func @transform_3(%arg0: i32) -> (i32, i32) {
    %c0_i32 = arith.constant 0 : i32
    %c0_i32_0 = arith.constant 0 : i32
    %c0_i32_1 = arith.constant 0 : i32
    return %c0_i32, %c0_i32_0 : i32, i32
  }
  func.func @transform_4(%arg0: i32) -> (i32, i32) {
    %c0_i32 = arith.constant 0 : i32
    %c0_i32_0 = arith.constant 0 : i32
    %c0_i32_1 = arith.constant 0 : i32
    return %c0_i32, %c0_i32_0 : i32, i32
  }
  func.func @transform_5(%arg0: i32) -> (i32, i32) {
    %c0_i32 = arith.constant 0 : i32
    %c0_i32_0 = arith.constant 0 : i32
    %c0_i32_1 = arith.constant 0 : i32
    return %c0_i32, %c0_i32_0 : i32, i32
  }
  func.func @transform_6(%arg0: i32) -> (i32, i32) {
    %c0_i32 = arith.constant 0 : i32
    %c0_i32_0 = arith.constant 0 : i32
    %c0_i32_1 = arith.constant 0 : i32
    return %c0_i32, %c0_i32_0 : i32, i32
  }
  func.func @transform_7(%arg0: i32) -> (i32, i32) {
    %c0_i32 = arith.constant 0 : i32
    %c0_i32_0 = arith.constant 0 : i32
    %c0_i32_1 = arith.constant 0 : i32
    return %c0_i32, %c0_i32_0 : i32, i32
  }
  func.func @transform_8(%arg0: i32) -> (i32, i32, i32) {
    %c0_i32 = arith.constant 0 : i32
    %c0_i32_0 = arith.constant 0 : i32
    %c0_i32_1 = arith.constant 0 : i32
    return %arg0, %c0_i32, %c0_i32_0 : i32, i32, i32
  }
  func.func @transform_9(%arg0: i32) -> (i32, i32, i32) {
    %c0_i32 = arith.constant 0 : i32
    %c0_i32_0 = arith.constant 0 : i32
    %c0_i32_1 = arith.constant 0 : i32
    return %arg0, %c0_i32, %c0_i32_0 : i32, i32, i32
  }
}

</mosaic_0001>

<llo_original>
// kernel: encoder_layer.1
$region0: #{encoder_layer.1}
  #allocation0 [shape = 'u32[]', space=smem, size = 0x4, offset = 0x4, fixed_abs, tag = 'smem constant byte address 0x4 - core index']
  #allocation1 [shape = 'u32[144,128]{1,0:T(1,128)}', space=vmem, size = 0x12000, scoped, tag = 'internal scratch']
  %s0 = inlined_call_operand.vmem [shape: f32[2,8,32], index: 0, kind: input, shape index: {}]
  %s1 = inlined_call_operand.vmem [shape: f32[32,96], index: 1, kind: input, shape index: {}]
  %s2 = inlined_call_operand.vmem [shape: f32[1,96], index: 2, kind: input, shape index: {}]
  %s3 = inlined_call_operand.vmem [shape: f32[32,32], index: 3, kind: input, shape index: {}]
  %s4 = inlined_call_operand.vmem [shape: f32[32,64], index: 4, kind: input, shape index: {}]
  %s5 = inlined_call_operand.vmem [shape: f32[1,64], index: 5, kind: input, shape index: {}]
  %s6 = inlined_call_operand.vmem [shape: f32[64,32], index: 6, kind: input, shape index: {}]
  %s7 = inlined_call_operand.vmem [shape: f32[6,32], index: 7, kind: input, shape index: {}]
  %s8 = inlined_call_operand.vmem [shape: f32[2,8,32], index: 8, kind: output, shape index: {0}]
  %s9 = inlined_call_operand.hbm [shape: f32[2,8,8], index: 9, kind: output, shape index: {1}]
  %10 = xla_tuple %s8, %s9
  %s11 = sld [smem:[#allocation0]]
  $region50: #{encoder_layer.1} parent=0
    _
  %s13 = ssub.s32 1, %s11
  %s14 = scalar_select 0, %s13, %s11
  $region1: #{encoder_layer.1} parent=0
    #allocation2 [shape = 'u8[8192]{0}', space=vmem, size = 0x2000, scoped, tag = 'output window, operand 1, single buffered']
    #allocation3 [shape = 's32[1]{0}', space=sflag, size = 0x4, scoped, tag = 'scoped memory for encoder_layer.1']
    %15 = vsyncpa [#allocation3], 0
    // Predicated region
    $region2: #{encoder_layer.1} parent=1 // pred_check
      _
    $region3: #{encoder_layer.1} parent=1 // pred_check_branch
      %17 = sbr.rel (0) target = $region5
    $region4: #{encoder_layer.1} parent=1 // pred_region
      _
    $region5: #{encoder_layer.1} parent=1 // pred_fallthru
      _
    // Predicated region
    $region6: #{encoder_layer.1} parent=1 // pred_check
      _
    $region7: #{encoder_layer.1} parent=1 // pred_check_branch
      %19 = sbr.rel (0) target = $region9
    $region8: #{encoder_layer.1} parent=1 // pred_region
      _
    $region9: #{encoder_layer.1} parent=1 // pred_fallthru
      _
    // Predicated region
    $region10: #{encoder_layer.1} parent=1 // pred_check
      _
    $region11: #{encoder_layer.1} parent=1 // pred_check_branch
      %21 = sbr.rel (0) target = $region13
    $region12: #{encoder_layer.1} parent=1 // pred_region
      _
    $region13: #{encoder_layer.1} parent=1 // pred_fallthru
      _
    // Predicated region
    $region14: #{encoder_layer.1} parent=1 // pred_check
      _
    $region15: #{encoder_layer.1} parent=1 // pred_check_branch
      %23 = sbr.rel (0) target = $region17
    $region16: #{encoder_layer.1} parent=1 // pred_region
      _
    $region17: #{encoder_layer.1} parent=1 // pred_fallthru
      _
    // Predicated region
    $region18: #{encoder_layer.1} parent=1 // pred_check
      _
    $region19: #{encoder_layer.1} parent=1 // pred_check_branch
      %25 = sbr.rel (0) target = $region21
    $region20: #{encoder_layer.1} parent=1 // pred_region
      _
    $region21: #{encoder_layer.1} parent=1 // pred_fallthru
      _
    // Predicated region
    $region22: #{encoder_layer.1} parent=1 // pred_check
      _
    $region23: #{encoder_layer.1} parent=1 // pred_check_branch
      %27 = sbr.rel (0) target = $region25
    $region24: #{encoder_layer.1} parent=1 // pred_region
      _
    $region25: #{encoder_layer.1} parent=1 // pred_fallthru
      _
    // Predicated region
    $region26: #{encoder_layer.1} parent=1 // pred_check
      _
    $region27: #{encoder_layer.1} parent=1 // pred_check_branch
      %29 = sbr.rel (0) target = $region29
    $region28: #{encoder_layer.1} parent=1 // pred_region
      _
    $region29: #{encoder_layer.1} parent=1 // pred_fallthru
      _
    // Predicated region
    $region30: #{encoder_layer.1} parent=1 // pred_check
      _
    $region31: #{encoder_layer.1} parent=1 // pred_check_branch
      %31 = sbr.rel (0) target = $region33
    $region32: #{encoder_layer.1} parent=1 // pred_region
      _
    $region33: #{encoder_layer.1} parent=1 // pred_fallthru
      _
    %v32 = vld [vmem:[%s7] sm:$0x3f]
    %v33 = vld [vmem:[%s0] sm:$0xff]
    %v34 = vld [vmem:[%s0 + $0x8] sm:$0xff]
    %v35 = vld [vmem:[%s1] sm:$0xff]
    %v36 = vld [vmem:[%s1 + $0x8] sm:$0xff]
    %v37 = vld [vmem:[%s1 + $0x10] sm:$0xff]
    %v38 = vld [vmem:[%s1 + $0x18] sm:$0xff]
    %v39 = vld [vmem:[%s2] sm:$0x1]
    %v41 = vlaneseq
    %v42 = vshrl.u32 %v41, 7
    %v43 = vsub.s32 0, %v42
    %v44 = vrot.slane %v39, %v43
    %vm46 = vcmask 261120
    %v48 = vsel %vm46, %v33, 0
    %v51 = vsel %vm46, %v34, 0
    %53 = vmatprep.subr.mxu0 0.0
    %54 = vmatpush1.msra.mxu0 0.0
    %55 = vmatprep.subr.mxu0 0.0
    %56 = vmatpush1.msra.mxu0 0.0
    %57 = vmatprep.subr.mxu0 0.0
    %58 = vmatpush1.msra.mxu0 0.0
    %59 = vmatprep.subr.mxu0 0.0
    %60 = vmatpush1.msra.mxu0 0.0
    %61 = vmatprep.subr.mxu0 0.0
    %62 = vmatpush1.msra.mxu0 0.0
    %63 = vmatprep.subr.mxu0 0.0
    %64 = vmatpush1.msra.mxu0 0.0
    %65 = vmatprep.subr.mxu0 0.0
    %66 = vmatpush1.msra.mxu0 0.0
    %67 = vmatprep.subr.mxu0 0.0
    %68 = vmatpush1.msra.mxu0 0.0
    %69 = vmatprep.subr.mxu0 0.0
    %70 = vmatpush1.msra.mxu0 0.0
    %71 = vmatprep.subr.mxu0 0.0
    %72 = vmatpush1.msra.mxu0 0.0
    %73 = vmatprep.subr.mxu0 0.0
    %74 = vmatpush1.msra.mxu0 0.0
    %75 = vmatprep.subr.mxu0 0.0
    %76 = vmatpush1.msra.mxu0 0.0
    %77 = vmatprep.subr.mxu0 0.0
    %78 = vmatpush1.msra.mxu0 %v38
    %79 = vmatprep.subr.mxu0 0.0
    %80 = vmatpush1.msra.mxu0 %v37
    %81 = vmatprep.subr.mxu0 0.0
    %82 = vmatpush1.msra.mxu0 %v36
    %83 = vmatprep.subr.mxu0 0.0
    %84 = vmatpush1.msra.mxu0 %v35
    %85 = vmatprep.subr.mxu0 0.0
    %86 = vmatpush2.msra.mxu0 0.0
    %87 = vmatprep.subr.mxu0 0.0
    %88 = vmatpush2.msra.mxu0 0.0
    %89 = vmatprep.subr.mxu0 0.0
    %90 = vmatpush2.msra.mxu0 0.0
    %91 = vmatprep.subr.mxu0 0.0
    %92 = vmatpush2.msra.mxu0 0.0
    %93 = vmatprep.subr.mxu0 0.0
    %94 = vmatpush2.msra.mxu0 0.0
    %95 = vmatprep.subr.mxu0 0.0
    %96 = vmatpush2.msra.mxu0 0.0
    %97 = vmatprep.subr.mxu0 0.0
    %98 = vmatpush2.msra.mxu0 0.0
    %99 = vmatprep.subr.mxu0 0.0
    %100 = vmatpush2.msra.mxu0 0.0
    %101 = vmatprep.subr.mxu0 0.0
    %102 = vmatpush2.msra.mxu0 0.0
    %103 = vmatprep.subr.mxu0 0.0
    %104 = vmatpush2.msra.mxu0 0.0
    %105 = vmatprep.subr.mxu0 0.0
    %106 = vmatpush2.msra.mxu0 0.0
    %107 = vmatprep.subr.mxu0 0.0
    %108 = vmatpush2.msra.mxu0 0.0
    %109 = vmatprep.subr.mxu0 0.0
    %110 = vmatpush2.msra.mxu0 0.0
    %111 = vmatprep.subr.mxu0 0.0
    %112 = vmatpush2.msra.mxu0 0.0
    %113 = vmatprep.subr.mxu0 0.0
    %114 = vmatpush2.msra.mxu0 0.0
    %115 = vmatprep.subr.mxu0 0.0
    %116 = vmatpush2.msra.mxu0 0.0
    %117 = vmatprep.mubr.f32.mxu0 0.0
    %118 = vmatmul.mubr.f32.gmra.mxu0 %v48
    %v119 = vpop.f32.mrf.mxu0
    %v120 = vadd.f32 %v44, %v119
    %v121 = vpop.f32.mrf.mxu0
    %122 = vmatprep.mubr.f32.mxu0 0.0
    %123 = vmatmul.mubr.f32.gmra.mxu0 %v51
    %v124 = vpop.f32.mrf.mxu0
    %v125 = vadd.f32 %v44, %v124
    %v126 = vpop.f32.mrf.mxu0
    %127 = vdwg.mxu0
    %129 = vrot.lane.b32.xlu0 %v120, 96
    %v130 = vpop.permute.xlu0 %129
    %vm131 = vcmask 64512
    %v132 = vsel %vm131, %v120, 0
    %v134 = vsel %vm131, %v130, 0
    %136 = vmatprep.subr.mxu0 0.0
    %137 = vmatpush1.xpose.msra.mxu0 0.0
    %138 = vmatprep.subr.mxu0 0.0
    %139 = vmatpush1.xpose.msra.mxu0 0.0
    %140 = vmatprep.subr.mxu0 0.0
    %141 = vmatpush1.xpose.msra.mxu0 0.0
    %142 = vmatprep.subr.mxu0 0.0
    %143 = vmatpush1.xpose.msra.mxu0 0.0
    %144 = vmatprep.subr.mxu0 0.0
    %145 = vmatpush1.xpose.msra.mxu0 0.0
    %146 = vmatprep.subr.mxu0 0.0
    %147 = vmatpush1.xpose.msra.mxu0 0.0
    %148 = vmatprep.subr.mxu0 0.0
    %149 = vmatpush1.xpose.msra.mxu0 0.0
    %150 = vmatprep.subr.mxu0 0.0
    %151 = vmatpush1.xpose.msra.mxu0 0.0
    %152 = vmatprep.subr.mxu0 0.0
    %153 = vmatpush1.xpose.msra.mxu0 0.0
    %154 = vmatprep.subr.mxu0 0.0
    %155 = vmatpush1.xpose.msra.mxu0 0.0
    %156 = vmatprep.subr.mxu0 0.0
    %157 = vmatpush1.xpose.msra.mxu0 0.0
    %158 = vmatprep.subr.mxu0 0.0
    %159 = vmatpush1.xpose.msra.mxu0 0.0
    %160 = vmatprep.subr.mxu0 0.0
    %161 = vmatpush1.xpose.msra.mxu0 0.0
    %162 = vmatprep.subr.mxu0 0.0
    %163 = vmatpush1.xpose.msra.mxu0 0.0
    %164 = vmatprep.subr.mxu0 0.0
    %165 = vmatpush1.xpose.msra.mxu0 0.0
    %166 = vmatprep.subr.mxu0 0.0
    %167 = vmatpush1.xpose.msra.mxu0 %v134
    %168 = vmatprep.subr.mxu0 0.0
    %169 = vmatpush2.xpose.msra.mxu0 0.0
    %170 = vmatprep.subr.mxu0 0.0
    %171 = vmatpush2.xpose.msra.mxu0 0.0
    %172 = vmatprep.subr.mxu0 0.0
    %173 = vmatpush2.xpose.msra.mxu0 0.0
    %174 = vmatprep.subr.mxu0 0.0
    %175 = vmatpush2.xpose.msra.mxu0 0.0
    %176 = vmatprep.subr.mxu0 0.0
    %177 = vmatpush2.xpose.msra.mxu0 0.0
    %178 = vmatprep.subr.mxu0 0.0
    %179 = vmatpush2.xpose.msra.mxu0 0.0
    %180 = vmatprep.subr.mxu0 0.0
    %181 = vmatpush2.xpose.msra.mxu0 0.0
    %182 = vmatprep.subr.mxu0 0.0
    %183 = vmatpush2.xpose.msra.mxu0 0.0
    %184 = vmatprep.subr.mxu0 0.0
    %185 = vmatpush2.xpose.msra.mxu0 0.0
    %186 = vmatprep.subr.mxu0 0.0
    %187 = vmatpush2.xpose.msra.mxu0 0.0
    %188 = vmatprep.subr.mxu0 0.0
    %189 = vmatpush2.xpose.msra.mxu0 0.0
    %190 = vmatprep.subr.mxu0 0.0
    %191 = vmatpush2.xpose.msra.mxu0 0.0
    %192 = vmatprep.subr.mxu0 0.0
    %193 = vmatpush2.xpose.msra.mxu0 0.0
    %194 = vmatprep.subr.mxu0 0.0
    %195 = vmatpush2.xpose.msra.mxu0 0.0
    %196 = vmatprep.subr.mxu0 0.0
    %197 = vmatpush2.xpose.msra.mxu0 0.0
    %198 = vmatprep.subr.mxu0 0.0
    %199 = vmatpush2.xpose.msra.mxu0 0.0
    %200 = vmatprep.mubr.f32.mxu0 0.0
    %201 = vmatmul.mubr.f32.gmra.mxu0 %v132
    %v202 = vpop.f32.mrf.mxu0
    %v203 = vadd.f32 0.0, %v202
    %v204 = vpop.f32.mrf.mxu0
    %205 = vdwg.mxu0
    %207 = vrot.lane.b32.xlu0 %v125, 96
    %v208 = vpop.permute.xlu0 %207
    %v209 = vsel %vm131, %v125, 0
    %v211 = vsel %vm131, %v208, 0
    %213 = vmatprep.subr.mxu0 0.0
    %214 = vmatpush1.xpose.msra.mxu0 0.0
    %215 = vmatprep.subr.mxu0 0.0
    %216 = vmatpush1.xpose.msra.mxu0 0.0
    %217 = vmatprep.subr.mxu0 0.0
    %218 = vmatpush1.xpose.msra.mxu0 0.0
    %219 = vmatprep.subr.mxu0 0.0
    %220 = vmatpush1.xpose.msra.mxu0 0.0
    %221 = vmatprep.subr.mxu0 0.0
    %222 = vmatpush1.xpose.msra.mxu0 0.0
    %223 = vmatprep.subr.mxu0 0.0
    %224 = vmatpush1.xpose.msra.mxu0 0.0
    %225 = vmatprep.subr.mxu0 0.0
    %226 = vmatpush1.xpose.msra.mxu0 0.0
    %227 = vmatprep.subr.mxu0 0.0
    %228 = vmatpush1.xpose.msra.mxu0 0.0
    %229 = vmatprep.subr.mxu0 0.0
    %230 = vmatpush1.xpose.msra.mxu0 0.0
    %231 = vmatprep.subr.mxu0 0.0
    %232 = vmatpush1.xpose.msra.mxu0 0.0
    %233 = vmatprep.subr.mxu0 0.0
    %234 = vmatpush1.xpose.msra.mxu0 0.0
    %235 = vmatprep.subr.mxu0 0.0
    %236 = vmatpush1.xpose.msra.mxu0 0.0
    %237 = vmatprep.subr.mxu0 0.0
    %238 = vmatpush1.xpose.msra.mxu0 0.0
    %239 = vmatprep.subr.mxu0 0.0
    %240 = vmatpush1.xpose.msra.mxu0 0.0
    %241 = vmatprep.subr.mxu0 0.0
    %242 = vmatpush1.xpose.msra.mxu0 0.0
    %243 = vmatprep.subr.mxu0 0.0
    %244 = vmatpush1.xpose.msra.mxu0 %v211
    %245 = vmatprep.subr.mxu0 0.0
    %246 = vmatpush2.xpose.msra.mxu0 0.0
    %247 = vmatprep.subr.mxu0 0.0
    %248 = vmatpush2.xpose.msra.mxu0 0.0
    %249 = vmatprep.subr.mxu0 0.0
    %250 = vmatpush2.xpose.msra.mxu0 0.0
    %251 = vmatprep.subr.mxu0 0.0
    %252 = vmatpush2.xpose.msra.mxu0 0.0
    %253 = vmatprep.subr.mxu0 0.0
    %254 = vmatpush2.xpose.msra.mxu0 0.0
    %255 = vmatprep.subr.mxu0 0.0
    %256 = vmatpush2.xpose.msra.mxu0 0.0
    %257 = vmatprep.subr.mxu0 0.0
    %258 = vmatpush2.xpose.msra.mxu0 0.0
    %259 = vmatprep.subr.mxu0 0.0
    %260 = vmatpush2.xpose.msra.mxu0 0.0
    %261 = vmatprep.subr.mxu0 0.0
    %262 = vmatpush2.xpose.msra.mxu0 0.0
    %263 = vmatprep.subr.mxu0 0.0
    %264 = vmatpush2.xpose.msra.mxu0 0.0
    %265 = vmatprep.subr.mxu0 0.0
    %266 = vmatpush2.xpose.msra.mxu0 0.0
    %267 = vmatprep.subr.mxu0 0.0
    %268 = vmatpush2.xpose.msra.mxu0 0.0
    %269 = vmatprep.subr.mxu0 0.0
    %270 = vmatpush2.xpose.msra.mxu0 0.0
    %271 = vmatprep.subr.mxu0 0.0
    %272 = vmatpush2.xpose.msra.mxu0 0.0
    %273 = vmatprep.subr.mxu0 0.0
    %274 = vmatpush2.xpose.msra.mxu0 0.0
    %275 = vmatprep.subr.mxu0 0.0
    %276 = vmatpush2.xpose.msra.mxu0 0.0
    %277 = vmatprep.mubr.f32.mxu0 0.0
    %278 = vmatmul.mubr.f32.gmra.mxu0 %v209
    %v279 = vpop.f32.mrf.mxu0
    %v280 = vadd.f32 0.0, %v279
    %v281 = vpop.f32.mrf.mxu0
    %282 = vdwg.mxu0
    %v283 = vsel %vm131, %v203, -inf
    %284 = vmax.xlane.f32.xlu0 %v283
    %v285 = vpop.xlane.xlu0 %284
    %v286 = vsel %vm131, %v280, -inf
    %287 = vmax.xlane.f32.xlu0 %v286
    %v288 = vpop.xlane.xlu0 %287
    %v289 = vsub.f32 %v203, %v285
    %v290 = vsub.f32 %v280, %v288
    %v291 = vmul.f32 %v289, 1.442695
    %v292 = vpow.pop %v291
    %v293 = vmul.f32 %v290, 1.442695
    %v294 = vpow.pop %v293
    %v295 = vsel %vm131, %v292, 0.0
    %296 = vadd.xlane.f32.xlu0 %v295
    %v297 = vpop.xlane.xlu0 %296
    %v298 = vsel %vm131, %v294, 0.0
    %299 = vadd.xlane.f32.xlu0 %v298
    %v300 = vpop.xlane.xlu0 %299
    %v301 = vrcp.pop %v297
    %v302 = vrcp.pop %v300
    %v303 = vmul.f32 %v292, %v301
    %v304 = vmul.f32 %v294, %v302
    %v305 = vadd.f32 %v303, 0.0
    %v306 = vadd.f32 %v304, 0.0
    %307 = vrot.lane.b32.xlu0 %v120, 64
    %v308 = vpop.permute.xlu0 %307
    %v311 = vsel %vm131, %v303, 0
    %313 = vmatprep.subr.mxu0 0.0
    %314 = vmatpush1.msra.mxu0 0.0
    %315 = vmatprep.subr.mxu0 0.0
    %316 = vmatpush1.msra.mxu0 0.0
    %317 = vmatprep.subr.mxu0 0.0
    %318 = vmatpush1.msra.mxu0 0.0
    %319 = vmatprep.subr.mxu0 0.0
    %320 = vmatpush1.msra.mxu0 0.0
    %321 = vmatprep.subr.mxu0 0.0
    %322 = vmatpush1.msra.mxu0 0.0
    %323 = vmatprep.subr.mxu0 0.0
    %324 = vmatpush1.msra.mxu0 0.0
    %325 = vmatprep.subr.mxu0 0.0
    %326 = vmatpush1.msra.mxu0 0.0
    %327 = vmatprep.subr.mxu0 0.0
    %328 = vmatpush1.msra.mxu0 0.0
    %329 = vmatprep.subr.mxu0 0.0
    %330 = vmatpush1.msra.mxu0 0.0
    %331 = vmatprep.subr.mxu0 0.0
    %332 = vmatpush1.msra.mxu0 0.0
    %333 = vmatprep.subr.mxu0 0.0
    %334 = vmatpush1.msra.mxu0 0.0
    %335 = vmatprep.subr.mxu0 0.0
    %336 = vmatpush1.msra.mxu0 0.0
    %337 = vmatprep.subr.mxu0 0.0
    %338 = vmatpush1.msra.mxu0 0.0
    %339 = vmatprep.subr.mxu0 0.0
    %340 = vmatpush1.msra.mxu0 0.0
    %341 = vmatprep.subr.mxu0 0.0
    %342 = vmatpush1.msra.mxu0 0.0
    %343 = vmatprep.subr.mxu0 0.0
    %344 = vmatpush1.msra.mxu0 %v308
    %345 = vmatprep.subr.mxu0 0.0
    %346 = vmatpush2.msra.mxu0 0.0
    %347 = vmatprep.subr.mxu0 0.0
    %348 = vmatpush2.msra.mxu0 0.0
    %349 = vmatprep.subr.mxu0 0.0
    %350 = vmatpush2.msra.mxu0 0.0
    %351 = vmatprep.subr.mxu0 0.0
    %352 = vmatpush2.msra.mxu0 0.0
    %353 = vmatprep.subr.mxu0 0.0
    %354 = vmatpush2.msra.mxu0 0.0
    %355 = vmatprep.subr.mxu0 0.0
    %356 = vmatpush2.msra.mxu0 0.0
    %357 = vmatprep.subr.mxu0 0.0
    %358 = vmatpush2.msra.mxu0 0.0
    %359 = vmatprep.subr.mxu0 0.0
    %360 = vmatpush2.msra.mxu0 0.0
    %361 = vmatprep.subr.mxu0 0.0
    %362 = vmatpush2.msra.mxu0 0.0
    %363 = vmatprep.subr.mxu0 0.0
    %364 = vmatpush2.msra.mxu0 0.0
    %365 = vmatprep.subr.mxu0 0.0
    %366 = vmatpush2.msra.mxu0 0.0
    %367 = vmatprep.subr.mxu0 0.0
    %368 = vmatpush2.msra.mxu0 0.0
    %369 = vmatprep.subr.mxu0 0.0
    %370 = vmatpush2.msra.mxu0 0.0
    %371 = vmatprep.subr.mxu0 0.0
    %372 = vmatpush2.msra.mxu0 0.0
    %373 = vmatprep.subr.mxu0 0.0
    %374 = vmatpush2.msra.mxu0 0.0
    %375 = vmatprep.subr.mxu0 0.0
    %376 = vmatpush2.msra.mxu0 0.0
    %377 = vmatprep.mubr.f32.mxu0 0.0
    %378 = vmatmul.mubr.f32.gmra.mxu0 %v311
    %v379 = vpop.f32.mrf.mxu0
    %v380 = vadd.f32 0.0, %v379
    %v381 = vpop.f32.mrf.mxu0
    %382 = vdwg.mxu0
    %383 = vrot.lane.b32.xlu0 %v125, 64
    %v384 = vpop.permute.xlu0 %383
    %v387 = vsel %vm131, %v304, 0
    %389 = vmatprep.subr.mxu0 0.0
    %390 = vmatpush1.msra.mxu0 0.0
    %391 = vmatprep.subr.mxu0 0.0
    %392 = vmatpush1.msra.mxu0 0.0
    %393 = vmatprep.subr.mxu0 0.0
    %394 = vmatpush1.msra.mxu0 0.0
    %395 = vmatprep.subr.mxu0 0.0
    %396 = vmatpush1.msra.mxu0 0.0
    %397 = vmatprep.subr.mxu0 0.0
    %398 = vmatpush1.msra.mxu0 0.0
    %399 = vmatprep.subr.mxu0 0.0
    %400 = vmatpush1.msra.mxu0 0.0
    %401 = vmatprep.subr.mxu0 0.0
    %402 = vmatpush1.msra.mxu0 0.0
    %403 = vmatprep.subr.mxu0 0.0
    %404 = vmatpush1.msra.mxu0 0.0
    %405 = vmatprep.subr.mxu0 0.0
    %406 = vmatpush1.msra.mxu0 0.0
    %407 = vmatprep.subr.mxu0 0.0
    %408 = vmatpush1.msra.mxu0 0.0
    %409 = vmatprep.subr.mxu0 0.0
    %410 = vmatpush1.msra.mxu0 0.0
    %411 = vmatprep.subr.mxu0 0.0
    %412 = vmatpush1.msra.mxu0 0.0
    %413 = vmatprep.subr.mxu0 0.0
    %414 = vmatpush1.msra.mxu0 0.0
    %415 = vmatprep.subr.mxu0 0.0
    %416 = vmatpush1.msra.mxu0 0.0
    %417 = vmatprep.subr.mxu0 0.0
    %418 = vmatpush1.msra.mxu0 0.0
    %419 = vmatprep.subr.mxu0 0.0
    %420 = vmatpush1.msra.mxu0 %v384
    %421 = vmatprep.subr.mxu0 0.0
    %422 = vmatpush2.msra.mxu0 0.0
    %423 = vmatprep.subr.mxu0 0.0
    %424 = vmatpush2.msra.mxu0 0.0
    %425 = vmatprep.subr.mxu0 0.0
    %426 = vmatpush2.msra.mxu0 0.0
    %427 = vmatprep.subr.mxu0 0.0
    %428 = vmatpush2.msra.mxu0 0.0
    %429 = vmatprep.subr.mxu0 0.0
    %430 = vmatpush2.msra.mxu0 0.0
    %431 = vmatprep.subr.mxu0 0.0
    %432 = vmatpush2.msra.mxu0 0.0
    %433 = vmatprep.subr.mxu0 0.0
    %434 = vmatpush2.msra.mxu0 0.0
    %435 = vmatprep.subr.mxu0 0.0
    %436 = vmatpush2.msra.mxu0 0.0
    %437 = vmatprep.subr.mxu0 0.0
    %438 = vmatpush2.msra.mxu0 0.0
    %439 = vmatprep.subr.mxu0 0.0
    %440 = vmatpush2.msra.mxu0 0.0
    %441 = vmatprep.subr.mxu0 0.0
    %442 = vmatpush2.msra.mxu0 0.0
    %443 = vmatprep.subr.mxu0 0.0
    %444 = vmatpush2.msra.mxu0 0.0
    %445 = vmatprep.subr.mxu0 0.0
    %446 = vmatpush2.msra.mxu0 0.0
    %447 = vmatprep.subr.mxu0 0.0
    %448 = vmatpush2.msra.mxu0 0.0
    %449 = vmatprep.subr.mxu0 0.0
    %450 = vmatpush2.msra.mxu0 0.0
    %451 = vmatprep.subr.mxu0 0.0
    %452 = vmatpush2.msra.mxu0 0.0
    %453 = vmatprep.mubr.f32.mxu0 0.0
    %454 = vmatmul.mubr.f32.gmra.mxu0 %v387
    %v455 = vpop.f32.mrf.mxu0
    %v456 = vadd.f32 0.0, %v455
    %v457 = vpop.f32.mrf.mxu0
    %458 = vdwg.mxu0
    %459 = vrot.lane.b32.xlu0 %v120, 120
    %v460 = vpop.permute.xlu0 %459
    %461 = vrot.lane.b32.xlu0 %v120, 88
    %v462 = vpop.permute.xlu0 %461
    %v463 = vsel %vm131, %v460, 0
    %v465 = vsel %vm131, %v462, 0
    %467 = vmatprep.subr.mxu0 0.0
    %468 = vmatpush1.xpose.msra.mxu0 0.0
    %469 = vmatprep.subr.mxu0 0.0
    %470 = vmatpush1.xpose.msra.mxu0 0.0
    %471 = vmatprep.subr.mxu0 0.0
    %472 = vmatpush1.xpose.msra.mxu0 0.0
    %473 = vmatprep.subr.mxu0 0.0
    %474 = vmatpush1.xpose.msra.mxu0 0.0
    %475 = vmatprep.subr.mxu0 0.0
    %476 = vmatpush1.xpose.msra.mxu0 0.0
    %477 = vmatprep.subr.mxu0 0.0
    %478 = vmatpush1.xpose.msra.mxu0 0.0
    %479 = vmatprep.subr.mxu0 0.0
    %480 = vmatpush1.xpose.msra.mxu0 0.0
    %481 = vmatprep.subr.mxu0 0.0
    %482 = vmatpush1.xpose.msra.mxu0 0.0
    %483 = vmatprep.subr.mxu0 0.0
    %484 = vmatpush1.xpose.msra.mxu0 0.0
    %485 = vmatprep.subr.mxu0 0.0
    %486 = vmatpush1.xpose.msra.mxu0 0.0
    %487 = vmatprep.subr.mxu0 0.0
    %488 = vmatpush1.xpose.msra.mxu0 0.0
    %489 = vmatprep.subr.mxu0 0.0
    %490 = vmatpush1.xpose.msra.mxu0 0.0
    %491 = vmatprep.subr.mxu0 0.0
    %492 = vmatpush1.xpose.msra.mxu0 0.0
    %493 = vmatprep.subr.mxu0 0.0
    %494 = vmatpush1.xpose.msra.mxu0 0.0
    %495 = vmatprep.subr.mxu0 0.0
    %496 = vmatpush1.xpose.msra.mxu0 0.0
    %497 = vmatprep.subr.mxu0 0.0
    %498 = vmatpush1.xpose.msra.mxu0 %v465
    %499 = vmatprep.subr.mxu0 0.0
    %500 = vmatpush2.xpose.msra.mxu0 0.0
    %501 = vmatprep.subr.mxu0 0.0
    %502 = vmatpush2.xpose.msra.mxu0 0.0
    %503 = vmatprep.subr.mxu0 0.0
    %504 = vmatpush2.xpose.msra.mxu0 0.0
    %505 = vmatprep.subr.mxu0 0.0
    %506 = vmatpush2.xpose.msra.mxu0 0.0
    %507 = vmatprep.subr.mxu0 0.0
    %508 = vmatpush2.xpose.msra.mxu0 0.0
    %509 = vmatprep.subr.mxu0 0.0
    %510 = vmatpush2.xpose.msra.mxu0 0.0
    %511 = vmatprep.subr.mxu0 0.0
    %512 = vmatpush2.xpose.msra.mxu0 0.0
    %513 = vmatprep.subr.mxu0 0.0
    %514 = vmatpush2.xpose.msra.mxu0 0.0
    %515 = vmatprep.subr.mxu0 0.0
    %516 = vmatpush2.xpose.msra.mxu0 0.0
    %517 = vmatprep.subr.mxu0 0.0
    %518 = vmatpush2.xpose.msra.mxu0 0.0
    %519 = vmatprep.subr.mxu0 0.0
    %520 = vmatpush2.xpose.msra.mxu0 0.0
    %521 = vmatprep.subr.mxu0 0.0
    %522 = vmatpush2.xpose.msra.mxu0 0.0
    %523 = vmatprep.subr.mxu0 0.0
    %524 = vmatpush2.xpose.msra.mxu0 0.0
    %525 = vmatprep.subr.mxu0 0.0
    %526 = vmatpush2.xpose.msra.mxu0 0.0
    %527 = vmatprep.subr.mxu0 0.0
    %528 = vmatpush2.xpose.msra.mxu0 0.0
    %529 = vmatprep.subr.mxu0 0.0
    %530 = vmatpush2.xpose.msra.mxu0 0.0
    %531 = vmatprep.mubr.f32.mxu0 0.0
    %532 = vmatmul.mubr.f32.gmra.mxu0 %v463
    %v533 = vpop.f32.mrf.mxu0
    %v534 = vadd.f32 0.0, %v533
    %v535 = vpop.f32.mrf.mxu0
    %536 = vdwg.mxu0
    %537 = vrot.lane.b32.xlu0 %v125, 120
    %v538 = vpop.permute.xlu0 %537
    %539 = vrot.lane.b32.xlu0 %v125, 88
    %v540 = vpop.permute.xlu0 %539
    %v541 = vsel %vm131, %v538, 0
    %v543 = vsel %vm131, %v540, 0
    %545 = vmatprep.subr.mxu0 0.0
    %546 = vmatpush1.xpose.msra.mxu0 0.0
    %547 = vmatprep.subr.mxu0 0.0
    %548 = vmatpush1.xpose.msra.mxu0 0.0
    %549 = vmatprep.subr.mxu0 0.0
    %550 = vmatpush1.xpose.msra.mxu0 0.0
    %551 = vmatprep.subr.mxu0 0.0
    %552 = vmatpush1.xpose.msra.mxu0 0.0
    %553 = vmatprep.subr.mxu0 0.0
    %554 = vmatpush1.xpose.msra.mxu0 0.0
    %555 = vmatprep.subr.mxu0 0.0
    %556 = vmatpush1.xpose.msra.mxu0 0.0
    %557 = vmatprep.subr.mxu0 0.0
    %558 = vmatpush1.xpose.msra.mxu0 0.0
    %559 = vmatprep.subr.mxu0 0.0
    %560 = vmatpush1.xpose.msra.mxu0 0.0
    %561 = vmatprep.subr.mxu0 0.0
    %562 = vmatpush1.xpose.msra.mxu0 0.0
    %563 = vmatprep.subr.mxu0 0.0
    %564 = vmatpush1.xpose.msra.mxu0 0.0
    %565 = vmatprep.subr.mxu0 0.0
    %566 = vmatpush1.xpose.msra.mxu0 0.0
    %567 = vmatprep.subr.mxu0 0.0
    %568 = vmatpush1.xpose.msra.mxu0 0.0
    %569 = vmatprep.subr.mxu0 0.0
    %570 = vmatpush1.xpose.msra.mxu0 0.0
    %571 = vmatprep.subr.mxu0 0.0
    %572 = vmatpush1.xpose.msra.mxu0 0.0
    %573 = vmatprep.subr.mxu0 0.0
    %574 = vmatpush1.xpose.msra.mxu0 0.0
    %575 = vmatprep.subr.mxu0 0.0
    %576 = vmatpush1.xpose.msra.mxu0 %v543
    %577 = vmatprep.subr.mxu0 0.0
    %578 = vmatpush2.xpose.msra.mxu0 0.0
    %579 = vmatprep.subr.mxu0 0.0
    %580 = vmatpush2.xpose.msra.mxu0 0.0
    %581 = vmatprep.subr.mxu0 0.0
    %582 = vmatpush2.xpose.msra.mxu0 0.0
    %583 = vmatprep.subr.mxu0 0.0
    %584 = vmatpush2.xpose.msra.mxu0 0.0
    %585 = vmatprep.subr.mxu0 0.0
    %586 = vmatpush2.xpose.msra.mxu0 0.0
    %587 = vmatprep.subr.mxu0 0.0
    %588 = vmatpush2.xpose.msra.mxu0 0.0
    %589 = vmatprep.subr.mxu0 0.0
    %590 = vmatpush2.xpose.msra.mxu0 0.0
    %591 = vmatprep.subr.mxu0 0.0
    %592 = vmatpush2.xpose.msra.mxu0 0.0
    %593 = vmatprep.subr.mxu0 0.0
    %594 = vmatpush2.xpose.msra.mxu0 0.0
    %595 = vmatprep.subr.mxu0 0.0
    %596 = vmatpush2.xpose.msra.mxu0 0.0
    %597 = vmatprep.subr.mxu0 0.0
    %598 = vmatpush2.xpose.msra.mxu0 0.0
    %599 = vmatprep.subr.mxu0 0.0
    %600 = vmatpush2.xpose.msra.mxu0 0.0
    %601 = vmatprep.subr.mxu0 0.0
    %602 = vmatpush2.xpose.msra.mxu0 0.0
    %603 = vmatprep.subr.mxu0 0.0
    %604 = vmatpush2.xpose.msra.mxu0 0.0
    %605 = vmatprep.subr.mxu0 0.0
    %606 = vmatpush2.xpose.msra.mxu0 0.0
    %607 = vmatprep.subr.mxu0 0.0
    %608 = vmatpush2.xpose.msra.mxu0 0.0
    %609 = vmatprep.mubr.f32.mxu0 0.0
    %610 = vmatmul.mubr.f32.gmra.mxu0 %v541
    %v611 = vpop.f32.mrf.mxu0
    %v612 = vadd.f32 0.0, %v611
    %v613 = vpop.f32.mrf.mxu0
    %614 = vdwg.mxu0
    %v615 = vsel %vm131, %v534, -inf
    %616 = vmax.xlane.f32.xlu0 %v615
    %v617 = vpop.xlane.xlu0 %616
    %v618 = vsel %vm131, %v612, -inf
    %619 = vmax.xlane.f32.xlu0 %v618
    %v620 = vpop.xlane.xlu0 %619
    %v621 = vsub.f32 %v534, %v617
    %v622 = vsub.f32 %v612, %v620
    %v623 = vmul.f32 %v621, 1.442695
    %v624 = vpow.pop %v623
    %v625 = vmul.f32 %v622, 1.442695
    %v626 = vpow.pop %v625
    %v627 = vsel %vm131, %v624, 0.0
    %628 = vadd.xlane.f32.xlu0 %v627
    %v629 = vpop.xlane.xlu0 %628
    %v630 = vsel %vm131, %v626, 0.0
    %631 = vadd.xlane.f32.xlu0 %v630
    %v632 = vpop.xlane.xlu0 %631
    %v633 = vrcp.pop %v629
    %v634 = vrcp.pop %v632
    %v635 = vmul.f32 %v624, %v633
    %v636 = vmul.f32 %v626, %v634
    %v637 = vadd.f32 %v305, %v635
    %v638 = vadd.f32 %v306, %v636
    %639 = vrot.lane.b32.xlu0 %v120, 56
    %v640 = vpop.permute.xlu0 %639
    %v643 = vsel %vm131, %v635, 0
    %645 = vmatprep.subr.mxu0 0.0
    %646 = vmatpush1.msra.mxu0 0.0
    %647 = vmatprep.subr.mxu0 0.0
    %648 = vmatpush1.msra.mxu0 0.0
    %649 = vmatprep.subr.mxu0 0.0
    %650 = vmatpush1.msra.mxu0 0.0
    %651 = vmatprep.subr.mxu0 0.0
    %652 = vmatpush1.msra.mxu0 0.0
    %653 = vmatprep.subr.mxu0 0.0
    %654 = vmatpush1.msra.mxu0 0.0
    %655 = vmatprep.subr.mxu0 0.0
    %656 = vmatpush1.msra.mxu0 0.0
    %657 = vmatprep.subr.mxu0 0.0
    %658 = vmatpush1.msra.mxu0 0.0
    %659 = vmatprep.subr.mxu0 0.0
    %660 = vmatpush1.msra.mxu0 0.0
    %661 = vmatprep.subr.mxu0 0.0
    %662 = vmatpush1.msra.mxu0 0.0
    %663 = vmatprep.subr.mxu0 0.0
    %664 = vmatpush1.msra.mxu0 0.0
    %665 = vmatprep.subr.mxu0 0.0
    %666 = vmatpush1.msra.mxu0 0.0
    %667 = vmatprep.subr.mxu0 0.0
    %668 = vmatpush1.msra.mxu0 0.0
    %669 = vmatprep.subr.mxu0 0.0
    %670 = vmatpush1.msra.mxu0 0.0
    %671 = vmatprep.subr.mxu0 0.0
    %672 = vmatpush1.msra.mxu0 0.0
    %673 = vmatprep.subr.mxu0 0.0
    %674 = vmatpush1.msra.mxu0 0.0
    %675 = vmatprep.subr.mxu0 0.0
    %676 = vmatpush1.msra.mxu0 %v640
    %677 = vmatprep.subr.mxu0 0.0
    %678 = vmatpush2.msra.mxu0 0.0
    %679 = vmatprep.subr.mxu0 0.0
    %680 = vmatpush2.msra.mxu0 0.0
    %681 = vmatprep.subr.mxu0 0.0
    %682 = vmatpush2.msra.mxu0 0.0
    %683 = vmatprep.subr.mxu0 0.0
    %684 = vmatpush2.msra.mxu0 0.0
    %685 = vmatprep.subr.mxu0 0.0
    %686 = vmatpush2.msra.mxu0 0.0
    %687 = vmatprep.subr.mxu0 0.0
    %688 = vmatpush2.msra.mxu0 0.0
    %689 = vmatprep.subr.mxu0 0.0
    %690 = vmatpush2.msra.mxu0 0.0
    %691 = vmatprep.subr.mxu0 0.0
    %692 = vmatpush2.msra.mxu0 0.0
    %693 = vmatprep.subr.mxu0 0.0
    %694 = vmatpush2.msra.mxu0 0.0
    %695 = vmatprep.subr.mxu0 0.0
    %696 = vmatpush2.msra.mxu0 0.0
    %697 = vmatprep.subr.mxu0 0.0
    %698 = vmatpush2.msra.mxu0 0.0
    %699 = vmatprep.subr.mxu0 0.0
    %700 = vmatpush2.msra.mxu0 0.0
    %701 = vmatprep.subr.mxu0 0.0
    %702 = vmatpush2.msra.mxu0 0.0
    %703 = vmatprep.subr.mxu0 0.0
    %704 = vmatpush2.msra.mxu0 0.0
    %705 = vmatprep.subr.mxu0 0.0
    %706 = vmatpush2.msra.mxu0 0.0
    %707 = vmatprep.subr.mxu0 0.0
    %708 = vmatpush2.msra.mxu0 0.0
    %709 = vmatprep.mubr.f32.mxu0 0.0
    %710 = vmatmul.mubr.f32.gmra.mxu0 %v643
    %v711 = vpop.f32.mrf.mxu0
    %v712 = vadd.f32 0.0, %v711
    %v713 = vpop.f32.mrf.mxu0
    %714 = vdwg.mxu0
    %715 = vrot.lane.b32.xlu0 %v125, 56
    %v716 = vpop.permute.xlu0 %715
    %v719 = vsel %vm131, %v636, 0
    %721 = vmatprep.subr.mxu0 0.0
    %722 = vmatpush1.msra.mxu0 0.0
    %723 = vmatprep.subr.mxu0 0.0
    %724 = vmatpush1.msra.mxu0 0.0
    %725 = vmatprep.subr.mxu0 0.0
    %726 = vmatpush1.msra.mxu0 0.0
    %727 = vmatprep.subr.mxu0 0.0
    %728 = vmatpush1.msra.mxu0 0.0
    %729 = vmatprep.subr.mxu0 0.0
    %730 = vmatpush1.msra.mxu0 0.0
    %731 = vmatprep.subr.mxu0 0.0
    %732 = vmatpush1.msra.mxu0 0.0
    %733 = vmatprep.subr.mxu0 0.0
    %734 = vmatpush1.msra.mxu0 0.0
    %735 = vmatprep.subr.mxu0 0.0
    %736 = vmatpush1.msra.mxu0 0.0
    %737 = vmatprep.subr.mxu0 0.0
    %738 = vmatpush1.msra.mxu0 0.0
    %739 = vmatprep.subr.mxu0 0.0
    %740 = vmatpush1.msra.mxu0 0.0
    %741 = vmatprep.subr.mxu0 0.0
    %742 = vmatpush1.msra.mxu0 0.0
    %743 = vmatprep.subr.mxu0 0.0
    %744 = vmatpush1.msra.mxu0 0.0
    %745 = vmatprep.subr.mxu0 0.0
    %746 = vmatpush1.msra.mxu0 0.0
    %747 = vmatprep.subr.mxu0 0.0
    %748 = vmatpush1.msra.mxu0 0.0
    %749 = vmatprep.subr.mxu0 0.0
    %750 = vmatpush1.msra.mxu0 0.0
    %751 = vmatprep.subr.mxu0 0.0
    %752 = vmatpush1.msra.mxu0 %v716
    %753 = vmatprep.subr.mxu0 0.0
    %754 = vmatpush2.msra.mxu0 0.0
    %755 = vmatprep.subr.mxu0 0.0
    %756 = vmatpush2.msra.mxu0 0.0
    %757 = vmatprep.subr.mxu0 0.0
    %758 = vmatpush2.msra.mxu0 0.0
    %759 = vmatprep.subr.mxu0 0.0
    %760 = vmatpush2.msra.mxu0 0.0
    %761 = vmatprep.subr.mxu0 0.0
    %762 = vmatpush2.msra.mxu0 0.0
    %763 = vmatprep.subr.mxu0 0.0
    %764 = vmatpush2.msra.mxu0 0.0
    %765 = vmatprep.subr.mxu0 0.0
    %766 = vmatpush2.msra.mxu0 0.0
    %767 = vmatprep.subr.mxu0 0.0
    %768 = vmatpush2.msra.mxu0 0.0
    %769 = vmatprep.subr.mxu0 0.0
    %770 = vmatpush2.msra.mxu0 0.0
    %771 = vmatprep.subr.mxu0 0.0
    %772 = vmatpush2.msra.mxu0 0.0
    %773 = vmatprep.subr.mxu0 0.0
    %774 = vmatpush2.msra.mxu0 0.0
    %775 = vmatprep.subr.mxu0 0.0
    %776 = vmatpush2.msra.mxu0 0.0
    %777 = vmatprep.subr.mxu0 0.0
    %778 = vmatpush2.msra.mxu0 0.0
    %779 = vmatprep.subr.mxu0 0.0
    %780 = vmatpush2.msra.mxu0 0.0
    %781 = vmatprep.subr.mxu0 0.0
    %782 = vmatpush2.msra.mxu0 0.0
    %783 = vmatprep.subr.mxu0 0.0
    %784 = vmatpush2.msra.mxu0 0.0
    %785 = vmatprep.mubr.f32.mxu0 0.0
    %786 = vmatmul.mubr.f32.gmra.mxu0 %v719
    %v787 = vpop.f32.mrf.mxu0
    %v788 = vadd.f32 0.0, %v787
    %v789 = vpop.f32.mrf.mxu0
    %790 = vdwg.mxu0
    %791 = vrot.lane.b32.xlu0 %v120, 112
    %v792 = vpop.permute.xlu0 %791
    %793 = vrot.lane.b32.xlu0 %v120, 80
    %v794 = vpop.permute.xlu0 %793
    %v795 = vsel %vm131, %v792, 0
    %v797 = vsel %vm131, %v794, 0
    %799 = vmatprep.subr.mxu0 0.0
    %800 = vmatpush1.xpose.msra.mxu0 0.0
    %801 = vmatprep.subr.mxu0 0.0
    %802 = vmatpush1.xpose.msra.mxu0 0.0
    %803 = vmatprep.subr.mxu0 0.0
    %804 = vmatpush1.xpose.msra.mxu0 0.0
    %805 = vmatprep.subr.mxu0 0.0
    %806 = vmatpush1.xpose.msra.mxu0 0.0
    %807 = vmatprep.subr.mxu0 0.0
    %808 = vmatpush1.xpose.msra.mxu0 0.0
    %809 = vmatprep.subr.mxu0 0.0
    %810 = vmatpush1.xpose.msra.mxu0 0.0
    %811 = vmatprep.subr.mxu0 0.0
    %812 = vmatpush1.xpose.msra.mxu0 0.0
    %813 = vmatprep.subr.mxu0 0.0
    %814 = vmatpush1.xpose.msra.mxu0 0.0
    %815 = vmatprep.subr.mxu0 0.0
    %816 = vmatpush1.xpose.msra.mxu0 0.0
    %817 = vmatprep.subr.mxu0 0.0
    %818 = vmatpush1.xpose.msra.mxu0 0.0
    %819 = vmatprep.subr.mxu0 0.0
    %820 = vmatpush1.xpose.msra.mxu0 0.0
    %821 = vmatprep.subr.mxu0 0.0
    %822 = vmatpush1.xpose.msra.mxu0 0.0
    %823 = vmatprep.subr.mxu0 0.0
    %824 = vmatpush1.xpose.msra.mxu0 0.0
    %825 = vmatprep.subr.mxu0 0.0
    %826 = vmatpush1.xpose.msra.mxu0 0.0
    %827 = vmatprep.subr.mxu0 0.0
    %828 = vmatpush1.xpose.msra.mxu0 0.0
    %829 = vmatprep.subr.mxu0 0.0
    %830 = vmatpush1.xpose.msra.mxu0 %v797
    %831 = vmatprep.subr.mxu0 0.0
    %832 = vmatpush2.xpose.msra.mxu0 0.0
    %833 = vmatprep.subr.mxu0 0.0
    %834 = vmatpush2.xpose.msra.mxu0 0.0
    %835 = vmatprep.subr.mxu0 0.0
    %836 = vmatpush2.xpose.msra.mxu0 0.0
    %837 = vmatprep.subr.mxu0 0.0
    %838 = vmatpush2.xpose.msra.mxu0 0.0
    %839 = vmatprep.subr.mxu0 0.0
    %840 = vmatpush2.xpose.msra.mxu0 0.0
    %841 = vmatprep.subr.mxu0 0.0
    %842 = vmatpush2.xpose.msra.mxu0 0.0
    %843 = vmatprep.subr.mxu0 0.0
    %844 = vmatpush2.xpose.msra.mxu0 0.0
    %845 = vmatprep.subr.mxu0 0.0
    %846 = vmatpush2.xpose.msra.mxu0 0.0
    %847 = vmatprep.subr.mxu0 0.0
    %848 = vmatpush2.xpose.msra.mxu0 0.0
    %849 = vmatprep.subr.mxu0 0.0
    %850 = vmatpush2.xpose.msra.mxu0 0.0
    %851 = vmatprep.subr.mxu0 0.0
    %852 = vmatpush2.xpose.msra.mxu0 0.0
    %853 = vmatprep.subr.mxu0 0.0
    %854 = vmatpush2.xpose.msra.mxu0 0.0
    %855 = vmatprep.subr.mxu0 0.0
    %856 = vmatpush2.xpose.msra.mxu0 0.0
    %857 = vmatprep.subr.mxu0 0.0
    %858 = vmatpush2.xpose.msra.mxu0 0.0
    %859 = vmatprep.subr.mxu0 0.0
    %860 = vmatpush2.xpose.msra.mxu0 0.0
    %861 = vmatprep.subr.mxu0 0.0
    %862 = vmatpush2.xpose.msra.mxu0 0.0
    %863 = vmatprep.mubr.f32.mxu0 0.0
    %864 = vmatmul.mubr.f32.gmra.mxu0 %v795
    %v865 = vpop.f32.mrf.mxu0
    %v866 = vadd.f32 0.0, %v865
    %v867 = vpop.f32.mrf.mxu0
    %868 = vdwg.mxu0
    %869 = vrot.lane.b32.xlu0 %v125, 112
    %v870 = vpop.permute.xlu0 %869
    %871 = vrot.lane.b32.xlu0 %v125, 80
    %v872 = vpop.permute.xlu0 %871
    %v873 = vsel %vm131, %v870, 0
    %v875 = vsel %vm131, %v872, 0
    %877 = vmatprep.subr.mxu0 0.0
    %878 = vmatpush1.xpose.msra.mxu0 0.0
    %879 = vmatprep.subr.mxu0 0.0
    %880 = vmatpush1.xpose.msra.mxu0 0.0
    %881 = vmatprep.subr.mxu0 0.0
    %882 = vmatpush1.xpose.msra.mxu0 0.0
    %883 = vmatprep.subr.mxu0 0.0
    %884 = vmatpush1.xpose.msra.mxu0 0.0
    %885 = vmatprep.subr.mxu0 0.0
    %886 = vmatpush1.xpose.msra.mxu0 0.0
    %887 = vmatprep.subr.mxu0 0.0
    %888 = vmatpush1.xpose.msra.mxu0 0.0
    %889 = vmatprep.subr.mxu0 0.0
    %890 = vmatpush1.xpose.msra.mxu0 0.0
    %891 = vmatprep.subr.mxu0 0.0
    %892 = vmatpush1.xpose.msra.mxu0 0.0
    %893 = vmatprep.subr.mxu0 0.0
    %894 = vmatpush1.xpose.msra.mxu0 0.0
    %895 = vmatprep.subr.mxu0 0.0
    %896 = vmatpush1.xpose.msra.mxu0 0.0
    %897 = vmatprep.subr.mxu0 0.0
    %898 = vmatpush1.xpose.msra.mxu0 0.0
    %899 = vmatprep.subr.mxu0 0.0
    %900 = vmatpush1.xpose.msra.mxu0 0.0
    %901 = vmatprep.subr.mxu0 0.0
    %902 = vmatpush1.xpose.msra.mxu0 0.0
    %903 = vmatprep.subr.mxu0 0.0
    %904 = vmatpush1.xpose.msra.mxu0 0.0
    %905 = vmatprep.subr.mxu0 0.0
    %906 = vmatpush1.xpose.msra.mxu0 0.0
    %907 = vmatprep.subr.mxu0 0.0
    %908 = vmatpush1.xpose.msra.mxu0 %v875
    %909 = vmatprep.subr.mxu0 0.0
    %910 = vmatpush2.xpose.msra.mxu0 0.0
    %911 = vmatprep.subr.mxu0 0.0
    %912 = vmatpush2.xpose.msra.mxu0 0.0
    %913 = vmatprep.subr.mxu0 0.0
    %914 = vmatpush2.xpose.msra.mxu0 0.0
    %915 = vmatprep.subr.mxu0 0.0
    %916 = vmatpush2.xpose.msra.mxu0 0.0
    %917 = vmatprep.subr.mxu0 0.0
    %918 = vmatpush2.xpose.msra.mxu0 0.0
    %919 = vmatprep.subr.mxu0 0.0
    %920 = vmatpush2.xpose.msra.mxu0 0.0
    %921 = vmatprep.subr.mxu0 0.0
    %922 = vmatpush2.xpose.msra.mxu0 0.0
    %923 = vmatprep.subr.mxu0 0.0
    %924 = vmatpush2.xpose.msra.mxu0 0.0
    %925 = vmatprep.subr.mxu0 0.0
    %926 = vmatpush2.xpose.msra.mxu0 0.0
    %927 = vmatprep.subr.mxu0 0.0
    %928 = vmatpush2.xpose.msra.mxu0 0.0
    %929 = vmatprep.subr.mxu0 0.0
    %930 = vmatpush2.xpose.msra.mxu0 0.0
    %931 = vmatprep.subr.mxu0 0.0
    %932 = vmatpush2.xpose.msra.mxu0 0.0
    %933 = vmatprep.subr.mxu0 0.0
    %934 = vmatpush2.xpose.msra.mxu0 0.0
    %935 = vmatprep.subr.mxu0 0.0
    %936 = vmatpush2.xpose.msra.mxu0 0.0
    %937 = vmatprep.subr.mxu0 0.0
    %938 = vmatpush2.xpose.msra.mxu0 0.0
    %939 = vmatprep.subr.mxu0 0.0
    %940 = vmatpush2.xpose.msra.mxu0 0.0
    %941 = vmatprep.mubr.f32.mxu0 0.0
    %942 = vmatmul.mubr.f32.gmra.mxu0 %v873
    %v943 = vpop.f32.mrf.mxu0
    %v944 = vadd.f32 0.0, %v943
    %v945 = vpop.f32.mrf.mxu0
    %946 = vdwg.mxu0
    %v947 = vsel %vm131, %v866, -inf
    %948 = vmax.xlane.f32.xlu0 %v947
    %v949 = vpop.xlane.xlu0 %948
    %v950 = vsel %vm131, %v944, -inf
    %951 = vmax.xlane.f32.xlu0 %v950
    %v952 = vpop.xlane.xlu0 %951
    %v953 = vsub.f32 %v866, %v949
    %v954 = vsub.f32 %v944, %v952
    %v955 = vmul.f32 %v953, 1.442695
    %v956 = vpow.pop %v955
    %v957 = vmul.f32 %v954, 1.442695
    %v958 = vpow.pop %v957
    %v959 = vsel %vm131, %v956, 0.0
    %960 = vadd.xlane.f32.xlu0 %v959
    %v961 = vpop.xlane.xlu0 %960
    %v962 = vsel %vm131, %v958, 0.0
    %963 = vadd.xlane.f32.xlu0 %v962
    %v964 = vpop.xlane.xlu0 %963
    %v965 = vrcp.pop %v961
    %v966 = vrcp.pop %v964
    %v967 = vmul.f32 %v956, %v965
    %v968 = vmul.f32 %v958, %v966
    %v969 = vadd.f32 %v637, %v967
    %v970 = vadd.f32 %v638, %v968
    %971 = vrot.lane.b32.xlu0 %v120, 48
    %v972 = vpop.permute.xlu0 %971
    %v975 = vsel %vm131, %v967, 0
    %977 = vmatprep.subr.mxu0 0.0
    %978 = vmatpush1.msra.mxu0 0.0
    %979 = vmatprep.subr.mxu0 0.0
    %980 = vmatpush1.msra.mxu0 0.0
    %981 = vmatprep.subr.mxu0 0.0
    %982 = vmatpush1.msra.mxu0 0.0
    %983 = vmatprep.subr.mxu0 0.0
    %984 = vmatpush1.msra.mxu0 0.0
    %985 = vmatprep.subr.mxu0 0.0
    %986 = vmatpush1.msra.mxu0 0.0
    %987 = vmatprep.subr.mxu0 0.0
    %988 = vmatpush1.msra.mxu0 0.0
    %989 = vmatprep.subr.mxu0 0.0
    %990 = vmatpush1.msra.mxu0 0.0
    %991 = vmatprep.subr.mxu0 0.0
    %992 = vmatpush1.msra.mxu0 0.0
    %993 = vmatprep.subr.mxu0 0.0
    %994 = vmatpush1.msra.mxu0 0.0
    %995 = vmatprep.subr.mxu0 0.0
    %996 = vmatpush1.msra.mxu0 0.0
    %997 = vmatprep.subr.mxu0 0.0
    %998 = vmatpush1.msra.mxu0 0.0
    %999 = vmatprep.subr.mxu0 0.0
    %1000 = vmatpush1.msra.mxu0 0.0
    %1001 = vmatprep.subr.mxu0 0.0
    %1002 = vmatpush1.msra.mxu0 0.0
    %1003 = vmatprep.subr.mxu0 0.0
    %1004 = vmatpush1.msra.mxu0 0.0
    %1005 = vmatprep.subr.mxu0 0.0
    %1006 = vmatpush1.msra.mxu0 0.0
    %1007 = vmatprep.subr.mxu0 0.0
    %1008 = vmatpush1.msra.mxu0 %v972
    %1009 = vmatprep.subr.mxu0 0.0
    %1010 = vmatpush2.msra.mxu0 0.0
    %1011 = vmatprep.subr.mxu0 0.0
    %1012 = vmatpush2.msra.mxu0 0.0
    %1013 = vmatprep.subr.mxu0 0.0
    %1014 = vmatpush2.msra.mxu0 0.0
    %1015 = vmatprep.subr.mxu0 0.0
    %1016 = vmatpush2.msra.mxu0 0.0
    %1017 = vmatprep.subr.mxu0 0.0
    %1018 = vmatpush2.msra.mxu0 0.0
    %1019 = vmatprep.subr.mxu0 0.0
    %1020 = vmatpush2.msra.mxu0 0.0
    %1021 = vmatprep.subr.mxu0 0.0
    %1022 = vmatpush2.msra.mxu0 0.0
    %1023 = vmatprep.subr.mxu0 0.0
    %1024 = vmatpush2.msra.mxu0 0.0
    %1025 = vmatprep.subr.mxu0 0.0
    %1026 = vmatpush2.msra.mxu0 0.0
    %1027 = vmatprep.subr.mxu0 0.0
    %1028 = vmatpush2.msra.mxu0 0.0
    %1029 = vmatprep.subr.mxu0 0.0
    %1030 = vmatpush2.msra.mxu0 0.0
    %1031 = vmatprep.subr.mxu0 0.0
    %1032 = vmatpush2.msra.mxu0 0.0
    %1033 = vmatprep.subr.mxu0 0.0
    %1034 = vmatpush2.msra.mxu0 0.0
    %1035 = vmatprep.subr.mxu0 0.0
    %1036 = vmatpush2.msra.mxu0 0.0
    %1037 = vmatprep.subr.mxu0 0.0
    %1038 = vmatpush2.msra.mxu0 0.0
    %1039 = vmatprep.subr.mxu0 0.0
    %1040 = vmatpush2.msra.mxu0 0.0
    %1041 = vmatprep.mubr.f32.mxu0 0.0
    %1042 = vmatmul.mubr.f32.gmra.mxu0 %v975
    %v1043 = vpop.f32.mrf.mxu0
    %v1044 = vadd.f32 0.0, %v1043
    %v1045 = vpop.f32.mrf.mxu0
    %1046 = vdwg.mxu0
    %1047 = vrot.lane.b32.xlu0 %v125, 48
    %v1048 = vpop.permute.xlu0 %1047
    %v1051 = vsel %vm131, %v968, 0
    %1053 = vmatprep.subr.mxu0 0.0
    %1054 = vmatpush1.msra.mxu0 0.0
    %1055 = vmatprep.subr.mxu0 0.0
    %1056 = vmatpush1.msra.mxu0 0.0
    %1057 = vmatprep.subr.mxu0 0.0
    %1058 = vmatpush1.msra.mxu0 0.0
    %1059 = vmatprep.subr.mxu0 0.0
    %1060 = vmatpush1.msra.mxu0 0.0
    %1061 = vmatprep.subr.mxu0 0.0
    %1062 = vmatpush1.msra.mxu0 0.0
    %1063 = vmatprep.subr.mxu0 0.0
    %1064 = vmatpush1.msra.mxu0 0.0
    %1065 = vmatprep.subr.mxu0 0.0
    %1066 = vmatpush1.msra.mxu0 0.0
    %1067 = vmatprep.subr.mxu0 0.0
    %1068 = vmatpush1.msra.mxu0 0.0
    %1069 = vmatprep.subr.mxu0 0.0
    %1070 = vmatpush1.msra.mxu0 0.0
    %1071 = vmatprep.subr.mxu0 0.0
    %1072 = vmatpush1.msra.mxu0 0.0
    %1073 = vmatprep.subr.mxu0 0.0
    %1074 = vmatpush1.msra.mxu0 0.0
    %1075 = vmatprep.subr.mxu0 0.0
    %1076 = vmatpush1.msra.mxu0 0.0
    %1077 = vmatprep.subr.mxu0 0.0
    %1078 = vmatpush1.msra.mxu0 0.0
    %1079 = vmatprep.subr.mxu0 0.0
    %1080 = vmatpush1.msra.mxu0 0.0
    %1081 = vmatprep.subr.mxu0 0.0
    %1082 = vmatpush1.msra.mxu0 0.0
    %1083 = vmatprep.subr.mxu0 0.0
    %1084 = vmatpush1.msra.mxu0 %v1048
    %1085 = vmatprep.subr.mxu0 0.0
    %1086 = vmatpush2.msra.mxu0 0.0
    %1087 = vmatprep.subr.mxu0 0.0
    %1088 = vmatpush2.msra.mxu0 0.0
    %1089 = vmatprep.subr.mxu0 0.0
    %1090 = vmatpush2.msra.mxu0 0.0
    %1091 = vmatprep.subr.mxu0 0.0
    %1092 = vmatpush2.msra.mxu0 0.0
    %1093 = vmatprep.subr.mxu0 0.0
    %1094 = vmatpush2.msra.mxu0 0.0
    %1095 = vmatprep.subr.mxu0 0.0
    %1096 = vmatpush2.msra.mxu0 0.0
    %1097 = vmatprep.subr.mxu0 0.0
    %1098 = vmatpush2.msra.mxu0 0.0
    %1099 = vmatprep.subr.mxu0 0.0
    %1100 = vmatpush2.msra.mxu0 0.0
    %1101 = vmatprep.subr.mxu0 0.0
    %1102 = vmatpush2.msra.mxu0 0.0
    %1103 = vmatprep.subr.mxu0 0.0
    %1104 = vmatpush2.msra.mxu0 0.0
    %1105 = vmatprep.subr.mxu0 0.0
    %1106 = vmatpush2.msra.mxu0 0.0
    %1107 = vmatprep.subr.mxu0 0.0
    %1108 = vmatpush2.msra.mxu0 0.0
    %1109 = vmatprep.subr.mxu0 0.0
    %1110 = vmatpush2.msra.mxu0 0.0
    %1111 = vmatprep.subr.mxu0 0.0
    %1112 = vmatpush2.msra.mxu0 0.0
    %1113 = vmatprep.subr.mxu0 0.0
    %1114 = vmatpush2.msra.mxu0 0.0
    %1115 = vmatprep.subr.mxu0 0.0
    %1116 = vmatpush2.msra.mxu0 0.0
    %1117 = vmatprep.mubr.f32.mxu0 0.0
    %1118 = vmatmul.mubr.f32.gmra.mxu0 %v1051
    %v1119 = vpop.f32.mrf.mxu0
    %v1120 = vadd.f32 0.0, %v1119
    %v1121 = vpop.f32.mrf.mxu0
    %1122 = vdwg.mxu0
    %1123 = vrot.lane.b32.xlu0 %v120, 104
    %v1124 = vpop.permute.xlu0 %1123
    %1125 = vrot.lane.b32.xlu0 %v120, 72
    %v1126 = vpop.permute.xlu0 %1125
    %v1127 = vsel %vm131, %v1124, 0
    %v1129 = vsel %vm131, %v1126, 0
    %1131 = vmatprep.subr.mxu0 0.0
    %1132 = vmatpush1.xpose.msra.mxu0 0.0
    %1133 = vmatprep.subr.mxu0 0.0
    %1134 = vmatpush1.xpose.msra.mxu0 0.0
    %1135 = vmatprep.subr.mxu0 0.0
    %1136 = vmatpush1.xpose.msra.mxu0 0.0
    %1137 = vmatprep.subr.mxu0 0.0
    %1138 = vmatpush1.xpose.msra.mxu0 0.0
    %1139 = vmatprep.subr.mxu0 0.0
    %1140 = vmatpush1.xpose.msra.mxu0 0.0
    %1141 = vmatprep.subr.mxu0 0.0
    %1142 = vmatpush1.xpose.msra.mxu0 0.0
    %1143 = vmatprep.subr.mxu0 0.0
    %1144 = vmatpush1.xpose.msra.mxu0 0.0
    %1145 = vmatprep.subr.mxu0 0.0
    %1146 = vmatpush1.xpose.msra.mxu0 0.0
    %1147 = vmatprep.subr.mxu0 0.0
    %1148 = vmatpush1.xpose.msra.mxu0 0.0
    %1149 = vmatprep.subr.mxu0 0.0
    %1150 = vmatpush1.xpose.msra.mxu0 0.0
    %1151 = vmatprep.subr.mxu0 0.0
    %1152 = vmatpush1.xpose.msra.mxu0 0.0
    %1153 = vmatprep.subr.mxu0 0.0
    %1154 = vmatpush1.xpose.msra.mxu0 0.0
    %1155 = vmatprep.subr.mxu0 0.0
    %1156 = vmatpush1.xpose.msra.mxu0 0.0
    %1157 = vmatprep.subr.mxu0 0.0
    %1158 = vmatpush1.xpose.msra.mxu0 0.0
    %1159 = vmatprep.subr.mxu0 0.0
    %1160 = vmatpush1.xpose.msra.mxu0 0.0
    %1161 = vmatprep.subr.mxu0 0.0
    %1162 = vmatpush1.xpose.msra.mxu0 %v1129
    %1163 = vmatprep.subr.mxu0 0.0
    %1164 = vmatpush2.xpose.msra.mxu0 0.0
    %1165 = vmatprep.subr.mxu0 0.0
    %1166 = vmatpush2.xpose.msra.mxu0 0.0
    %1167 = vmatprep.subr.mxu0 0.0
    %1168 = vmatpush2.xpose.msra.mxu0 0.0
    %1169 = vmatprep.subr.mxu0 0.0
    %1170 = vmatpush2.xpose.msra.mxu0 0.0
    %1171 = vmatprep.subr.mxu0 0.0
    %1172 = vmatpush2.xpose.msra.mxu0 0.0
    %1173 = vmatprep.subr.mxu0 0.0
    %1174 = vmatpush2.xpose.msra.mxu0 0.0
    %1175 = vmatprep.subr.mxu0 0.0
    %1176 = vmatpush2.xpose.msra.mxu0 0.0
    %1177 = vmatprep.subr.mxu0 0.0
    %1178 = vmatpush2.xpose.msra.mxu0 0.0
    %1179 = vmatprep.subr.mxu0 0.0
    %1180 = vmatpush2.xpose.msra.mxu0 0.0
    %1181 = vmatprep.subr.mxu0 0.0
    %1182 = vmatpush2.xpose.msra.mxu0 0.0
    %1183 = vmatprep.subr.mxu0 0.0
    %1184 = vmatpush2.xpose.msra.mxu0 0.0
    %1185 = vmatprep.subr.mxu0 0.0
    %1186 = vmatpush2.xpose.msra.mxu0 0.0
    %1187 = vmatprep.subr.mxu0 0.0
    %1188 = vmatpush2.xpose.msra.mxu0 0.0
    %1189 = vmatprep.subr.mxu0 0.0
    %1190 = vmatpush2.xpose.msra.mxu0 0.0
    %1191 = vmatprep.subr.mxu0 0.0
    %1192 = vmatpush2.xpose.msra.mxu0 0.0
    %1193 = vmatprep.subr.mxu0 0.0
    %1194 = vmatpush2.xpose.msra.mxu0 0.0
    %1195 = vmatprep.mubr.f32.mxu0 0.0
    %1196 = vmatmul.mubr.f32.gmra.mxu0 %v1127
    %v1197 = vpop.f32.mrf.mxu0
    %v1198 = vadd.f32 0.0, %v1197
    %v1199 = vpop.f32.mrf.mxu0
    %1200 = vdwg.mxu0
    %1201 = vrot.lane.b32.xlu0 %v125, 104
    %v1202 = vpop.permute.xlu0 %1201
    %1203 = vrot.lane.b32.xlu0 %v125, 72
    %v1204 = vpop.permute.xlu0 %1203
    %v1205 = vsel %vm131, %v1202, 0
    %v1207 = vsel %vm131, %v1204, 0
    %1209 = vmatprep.subr.mxu0 0.0
    %1210 = vmatpush1.xpose.msra.mxu0 0.0
    %1211 = vmatprep.subr.mxu0 0.0
    %1212 = vmatpush1.xpose.msra.mxu0 0.0
    %1213 = vmatprep.subr.mxu0 0.0
    %1214 = vmatpush1.xpose.msra.mxu0 0.0
    %1215 = vmatprep.subr.mxu0 0.0
    %1216 = vmatpush1.xpose.msra.mxu0 0.0
    %1217 = vmatprep.subr.mxu0 0.0
    %1218 = vmatpush1.xpose.msra.mxu0 0.0
    %1219 = vmatprep.subr.mxu0 0.0
    %1220 = vmatpush1.xpose.msra.mxu0 0.0
    %1221 = vmatprep.subr.mxu0 0.0
    %1222 = vmatpush1.xpose.msra.mxu0 0.0
    %1223 = vmatprep.subr.mxu0 0.0
    %1224 = vmatpush1.xpose.msra.mxu0 0.0
    %1225 = vmatprep.subr.mxu0 0.0
    %1226 = vmatpush1.xpose.msra.mxu0 0.0
    %1227 = vmatprep.subr.mxu0 0.0
    %1228 = vmatpush1.xpose.msra.mxu0 0.0
    %1229 = vmatprep.subr.mxu0 0.0
    %1230 = vmatpush1.xpose.msra.mxu0 0.0
    %1231 = vmatprep.subr.mxu0 0.0
    %1232 = vmatpush1.xpose.msra.mxu0 0.0
    %1233 = vmatprep.subr.mxu0 0.0
    %1234 = vmatpush1.xpose.msra.mxu0 0.0
    %1235 = vmatprep.subr.mxu0 0.0
    %1236 = vmatpush1.xpose.msra.mxu0 0.0
    %1237 = vmatprep.subr.mxu0 0.0
    %1238 = vmatpush1.xpose.msra.mxu0 0.0
    %1239 = vmatprep.subr.mxu0 0.0
    %1240 = vmatpush1.xpose.msra.mxu0 %v1207
    %1241 = vmatprep.subr.mxu0 0.0
    %1242 = vmatpush2.xpose.msra.mxu0 0.0
    %1243 = vmatprep.subr.mxu0 0.0
    %1244 = vmatpush2.xpose.msra.mxu0 0.0
    %1245 = vmatprep.subr.mxu0 0.0
    %1246 = vmatpush2.xpose.msra.mxu0 0.0
    %1247 = vmatprep.subr.mxu0 0.0
    %1248 = vmatpush2.xpose.msra.mxu0 0.0
    %1249 = vmatprep.subr.mxu0 0.0
    %1250 = vmatpush2.xpose.msra.mxu0 0.0
    %1251 = vmatprep.subr.mxu0 0.0
    %1252 = vmatpush2.xpose.msra.mxu0 0.0
    %1253 = vmatprep.subr.mxu0 0.0
    %1254 = vmatpush2.xpose.msra.mxu0 0.0
    %1255 = vmatprep.subr.mxu0 0.0
    %1256 = vmatpush2.xpose.msra.mxu0 0.0
    %1257 = vmatprep.subr.mxu0 0.0
    %1258 = vmatpush2.xpose.msra.mxu0 0.0
    %1259 = vmatprep.subr.mxu0 0.0
    %1260 = vmatpush2.xpose.msra.mxu0 0.0
    %1261 = vmatprep.subr.mxu0 0.0
    %1262 = vmatpush2.xpose.msra.mxu0 0.0
    %1263 = vmatprep.subr.mxu0 0.0
    %1264 = vmatpush2.xpose.msra.mxu0 0.0
    %1265 = vmatprep.subr.mxu0 0.0
    %1266 = vmatpush2.xpose.msra.mxu0 0.0
    %1267 = vmatprep.subr.mxu0 0.0
    %1268 = vmatpush2.xpose.msra.mxu0 0.0
    %1269 = vmatprep.subr.mxu0 0.0
    %1270 = vmatpush2.xpose.msra.mxu0 0.0
    %1271 = vmatprep.subr.mxu0 0.0
    %1272 = vmatpush2.xpose.msra.mxu0 0.0
    %1273 = vmatprep.mubr.f32.mxu0 0.0
    %1274 = vmatmul.mubr.f32.gmra.mxu0 %v1205
    %v1275 = vpop.f32.mrf.mxu0
    %v1276 = vadd.f32 0.0, %v1275
    %v1277 = vpop.f32.mrf.mxu0
    %1278 = vdwg.mxu0
    %v1279 = vsel %vm131, %v1198, -inf
    %1280 = vmax.xlane.f32.xlu0 %v1279
    %v1281 = vpop.xlane.xlu0 %1280
    %v1282 = vsel %vm131, %v1276, -inf
    %1283 = vmax.xlane.f32.xlu0 %v1282
    %v1284 = vpop.xlane.xlu0 %1283
    %v1285 = vsub.f32 %v1198, %v1281
    %v1286 = vsub.f32 %v1276, %v1284
    %v1287 = vmul.f32 %v1285, 1.442695
    %v1288 = vpow.pop %v1287
    %v1289 = vmul.f32 %v1286, 1.442695
    %v1290 = vpow.pop %v1289
    %v1291 = vsel %vm131, %v1288, 0.0
    %1292 = vadd.xlane.f32.xlu0 %v1291
    %v1293 = vpop.xlane.xlu0 %1292
    %v1294 = vsel %vm131, %v1290, 0.0
    %1295 = vadd.xlane.f32.xlu0 %v1294
    %v1296 = vpop.xlane.xlu0 %1295
    %v1297 = vrcp.pop %v1293
    %v1298 = vrcp.pop %v1296
    %v1299 = vmul.f32 %v1288, %v1297
    %v1300 = vmul.f32 %v1290, %v1298
    %v1301 = vadd.f32 %v969, %v1299
    %v1302 = vadd.f32 %v970, %v1300
    %1303 = vrot.lane.b32.xlu0 %v120, 40
    %v1304 = vpop.permute.xlu0 %1303
    %v1307 = vsel %vm131, %v1299, 0
    %1309 = vmatprep.subr.mxu0 0.0
    %1310 = vmatpush1.msra.mxu0 0.0
    %1311 = vmatprep.subr.mxu0 0.0
    %1312 = vmatpush1.msra.mxu0 0.0
    %1313 = vmatprep.subr.mxu0 0.0
    %1314 = vmatpush1.msra.mxu0 0.0
    %1315 = vmatprep.subr.mxu0 0.0
    %1316 = vmatpush1.msra.mxu0 0.0
    %1317 = vmatprep.subr.mxu0 0.0
    %1318 = vmatpush1.msra.mxu0 0.0
    %1319 = vmatprep.subr.mxu0 0.0
    %1320 = vmatpush1.msra.mxu0 0.0
    %1321 = vmatprep.subr.mxu0 0.0
    %1322 = vmatpush1.msra.mxu0 0.0
    %1323 = vmatprep.subr.mxu0 0.0
    %1324 = vmatpush1.msra.mxu0 0.0
    %1325 = vmatprep.subr.mxu0 0.0
    %1326 = vmatpush1.msra.mxu0 0.0
    %1327 = vmatprep.subr.mxu0 0.0
    %1328 = vmatpush1.msra.mxu0 0.0
    %1329 = vmatprep.subr.mxu0 0.0
    %1330 = vmatpush1.msra.mxu0 0.0
    %1331 = vmatprep.subr.mxu0 0.0
    %1332 = vmatpush1.msra.mxu0 0.0
    %1333 = vmatprep.subr.mxu0 0.0
    %1334 = vmatpush1.msra.mxu0 0.0
    %1335 = vmatprep.subr.mxu0 0.0
    %1336 = vmatpush1.msra.mxu0 0.0
    %1337 = vmatprep.subr.mxu0 0.0
    %1338 = vmatpush1.msra.mxu0 0.0
    %1339 = vmatprep.subr.mxu0 0.0
    %1340 = vmatpush1.msra.mxu0 %v1304
    %1341 = vmatprep.subr.mxu0 0.0
    %1342 = vmatpush2.msra.mxu0 0.0
    %1343 = vmatprep.subr.mxu0 0.0
    %1344 = vmatpush2.msra.mxu0 0.0
    %1345 = vmatprep.subr.mxu0 0.0
    %1346 = vmatpush2.msra.mxu0 0.0
    %1347 = vmatprep.subr.mxu0 0.0
    %1348 = vmatpush2.msra.mxu0 0.0
    %1349 = vmatprep.subr.mxu0 0.0
    %1350 = vmatpush2.msra.mxu0 0.0
    %1351 = vmatprep.subr.mxu0 0.0
    %1352 = vmatpush2.msra.mxu0 0.0
    %1353 = vmatprep.subr.mxu0 0.0
    %1354 = vmatpush2.msra.mxu0 0.0
    %1355 = vmatprep.subr.mxu0 0.0
    %1356 = vmatpush2.msra.mxu0 0.0
    %1357 = vmatprep.subr.mxu0 0.0
    %1358 = vmatpush2.msra.mxu0 0.0
    %1359 = vmatprep.subr.mxu0 0.0
    %1360 = vmatpush2.msra.mxu0 0.0
    %1361 = vmatprep.subr.mxu0 0.0
    %1362 = vmatpush2.msra.mxu0 0.0
    %1363 = vmatprep.subr.mxu0 0.0
    %1364 = vmatpush2.msra.mxu0 0.0
    %1365 = vmatprep.subr.mxu0 0.0
    %1366 = vmatpush2.msra.mxu0 0.0
    %1367 = vmatprep.subr.mxu0 0.0
    %1368 = vmatpush2.msra.mxu0 0.0
    %1369 = vmatprep.subr.mxu0 0.0
    %1370 = vmatpush2.msra.mxu0 0.0
    %1371 = vmatprep.subr.mxu0 0.0
    %1372 = vmatpush2.msra.mxu0 0.0
    %1373 = vmatprep.mubr.f32.mxu0 0.0
    %1374 = vmatmul.mubr.f32.gmra.mxu0 %v1307
    %v1375 = vpop.f32.mrf.mxu0
    %v1376 = vadd.f32 0.0, %v1375
    %v1377 = vpop.f32.mrf.mxu0
    %1378 = vdwg.mxu0
    %1379 = vrot.lane.b32.xlu0 %v125, 40
    %v1380 = vpop.permute.xlu0 %1379
    %v1383 = vsel %vm131, %v1300, 0
    %1385 = vmatprep.subr.mxu0 0.0
    %1386 = vmatpush1.msra.mxu0 0.0
    %1387 = vmatprep.subr.mxu0 0.0
    %1388 = vmatpush1.msra.mxu0 0.0
    %1389 = vmatprep.subr.mxu0 0.0
    %1390 = vmatpush1.msra.mxu0 0.0
    %1391 = vmatprep.subr.mxu0 0.0
    %1392 = vmatpush1.msra.mxu0 0.0
    %1393 = vmatprep.subr.mxu0 0.0
    %1394 = vmatpush1.msra.mxu0 0.0
    %1395 = vmatprep.subr.mxu0 0.0
    %1396 = vmatpush1.msra.mxu0 0.0
    %1397 = vmatprep.subr.mxu0 0.0
    %1398 = vmatpush1.msra.mxu0 0.0
    %1399 = vmatprep.subr.mxu0 0.0
    %1400 = vmatpush1.msra.mxu0 0.0
    %1401 = vmatprep.subr.mxu0 0.0
    %1402 = vmatpush1.msra.mxu0 0.0
    %1403 = vmatprep.subr.mxu0 0.0
    %1404 = vmatpush1.msra.mxu0 0.0
    %1405 = vmatprep.subr.mxu0 0.0
    %1406 = vmatpush1.msra.mxu0 0.0
    %1407 = vmatprep.subr.mxu0 0.0
    %1408 = vmatpush1.msra.mxu0 0.0
    %1409 = vmatprep.subr.mxu0 0.0
    %1410 = vmatpush1.msra.mxu0 0.0
    %1411 = vmatprep.subr.mxu0 0.0
    %1412 = vmatpush1.msra.mxu0 0.0
    %1413 = vmatprep.subr.mxu0 0.0
    %1414 = vmatpush1.msra.mxu0 0.0
    %1415 = vmatprep.subr.mxu0 0.0
    %1416 = vmatpush1.msra.mxu0 %v1380
    %1417 = vmatprep.subr.mxu0 0.0
    %1418 = vmatpush2.msra.mxu0 0.0
    %1419 = vmatprep.subr.mxu0 0.0
    %1420 = vmatpush2.msra.mxu0 0.0
    %1421 = vmatprep.subr.mxu0 0.0
    %1422 = vmatpush2.msra.mxu0 0.0
    %1423 = vmatprep.subr.mxu0 0.0
    %1424 = vmatpush2.msra.mxu0 0.0
    %1425 = vmatprep.subr.mxu0 0.0
    %1426 = vmatpush2.msra.mxu0 0.0
    %1427 = vmatprep.subr.mxu0 0.0
    %1428 = vmatpush2.msra.mxu0 0.0
    %1429 = vmatprep.subr.mxu0 0.0
    %1430 = vmatpush2.msra.mxu0 0.0
    %1431 = vmatprep.subr.mxu0 0.0
    %1432 = vmatpush2.msra.mxu0 0.0
    %1433 = vmatprep.subr.mxu0 0.0
    %1434 = vmatpush2.msra.mxu0 0.0
    %1435 = vmatprep.subr.mxu0 0.0
    %1436 = vmatpush2.msra.mxu0 0.0
    %1437 = vmatprep.subr.mxu0 0.0
    %1438 = vmatpush2.msra.mxu0 0.0
    %1439 = vmatprep.subr.mxu0 0.0
    %1440 = vmatpush2.msra.mxu0 0.0
    %1441 = vmatprep.subr.mxu0 0.0
    %1442 = vmatpush2.msra.mxu0 0.0
    %1443 = vmatprep.subr.mxu0 0.0
    %1444 = vmatpush2.msra.mxu0 0.0
    %1445 = vmatprep.subr.mxu0 0.0
    %1446 = vmatpush2.msra.mxu0 0.0
    %1447 = vmatprep.subr.mxu0 0.0
    %1448 = vmatpush2.msra.mxu0 0.0
    %1449 = vmatprep.mubr.f32.mxu0 0.0
    %1450 = vmatmul.mubr.f32.gmra.mxu0 %v1383
    %v1451 = vpop.f32.mrf.mxu0
    %v1452 = vadd.f32 0.0, %v1451
    %v1453 = vpop.f32.mrf.mxu0
    %1454 = vdwg.mxu0
    %v1455 = vmul.f32 %v1301, 0.25
    %v1456 = vmul.f32 %v1302, 0.25
    %1457 = vst.msk [vmem:[#allocation2] sm:$0xff] %vm131, %v1455
    %1458 = vst.msk [vmem:[#allocation2 + $0x8] sm:$0xff] %vm131, %v1456
    %1461 = vrot.lane.b32.xlu0 %v712, 8
    %v1462 = vpop.permute.xlu0 %1461
    %1463 = vrot.lane.b32.xlu0 %v788, 8
    %v1464 = vpop.permute.xlu0 %1463
    %1469 = vrot.lane.b32.xlu0 %v1044, 16
    %v1470 = vpop.permute.xlu0 %1469
    %1471 = vrot.lane.b32.xlu0 %v1120, 16
    %v1472 = vpop.permute.xlu0 %1471
    %1477 = vrot.lane.b32.xlu0 %v1376, 24
    %v1478 = vpop.permute.xlu0 %1477
    %1479 = vrot.lane.b32.xlu0 %v1452, 24
    %v1480 = vpop.permute.xlu0 %1479
    %v1483 = vsel %vm131, %v380, %v1462
    %v1484 = vsel %vm131, %v456, %v1464
    %vm1485 = vcmask 130048
    %v1486 = vsel %vm1485, %v1483, %v1470
    %v1487 = vsel %vm1485, %v1484, %v1472
    %vm1488 = vcmask 195584
    %v1489 = vsel %vm1488, %v1486, %v1478
    %v1490 = vsel %vm1488, %v1487, %v1480
    %v1491 = vld [vmem:[%s3] sm:$0xff]
    %v1492 = vld [vmem:[%s3 + $0x8] sm:$0xff]
    %v1493 = vld [vmem:[%s3 + $0x10] sm:$0xff]
    %v1494 = vld [vmem:[%s3 + $0x18] sm:$0xff]
    %v1495 = vlaneseq
    %v1496 = vshrl.u32 %v1495, 7
    %v1497 = vsub.s32 0, %v1496
    %v1498 = vrot.slane %v32, %v1497
    %v1500 = vsel %vm46, %v1489, 0
    %v1503 = vsel %vm46, %v1490, 0
    %1505 = vmatprep.subr.mxu0 0.0
    %1506 = vmatpush1.msra.mxu0 0.0
    %1507 = vmatprep.subr.mxu0 0.0
    %1508 = vmatpush1.msra.mxu0 0.0
    %1509 = vmatprep.subr.mxu0 0.0
    %1510 = vmatpush1.msra.mxu0 0.0
    %1511 = vmatprep.subr.mxu0 0.0
    %1512 = vmatpush1.msra.mxu0 0.0
    %1513 = vmatprep.subr.mxu0 0.0
    %1514 = vmatpush1.msra.mxu0 0.0
    %1515 = vmatprep.subr.mxu0 0.0
    %1516 = vmatpush1.msra.mxu0 0.0
    %1517 = vmatprep.subr.mxu0 0.0
    %1518 = vmatpush1.msra.mxu0 0.0
    %1519 = vmatprep.subr.mxu0 0.0
    %1520 = vmatpush1.msra.mxu0 0.0
    %1521 = vmatprep.subr.mxu0 0.0
    %1522 = vmatpush1.msra.mxu0 0.0
    %1523 = vmatprep.subr.mxu0 0.0
    %1524 = vmatpush1.msra.mxu0 0.0
    %1525 = vmatprep.subr.mxu0 0.0
    %1526 = vmatpush1.msra.mxu0 0.0
    %1527 = vmatprep.subr.mxu0 0.0
    %1528 = vmatpush1.msra.mxu0 0.0
    %1529 = vmatprep.subr.mxu0 0.0
    %1530 = vmatpush1.msra.mxu0 %v1494
    %1531 = vmatprep.subr.mxu0 0.0
    %1532 = vmatpush1.msra.mxu0 %v1493
    %1533 = vmatprep.subr.mxu0 0.0
    %1534 = vmatpush1.msra.mxu0 %v1492
    %1535 = vmatprep.subr.mxu0 0.0
    %1536 = vmatpush1.msra.mxu0 %v1491
    %1537 = vmatprep.subr.mxu0 0.0
    %1538 = vmatpush2.msra.mxu0 0.0
    %1539 = vmatprep.subr.mxu0 0.0
    %1540 = vmatpush2.msra.mxu0 0.0
    %1541 = vmatprep.subr.mxu0 0.0
    %1542 = vmatpush2.msra.mxu0 0.0
    %1543 = vmatprep.subr.mxu0 0.0
    %1544 = vmatpush2.msra.mxu0 0.0
    %1545 = vmatprep.subr.mxu0 0.0
    %1546 = vmatpush2.msra.mxu0 0.0
    %1547 = vmatprep.subr.mxu0 0.0
    %1548 = vmatpush2.msra.mxu0 0.0
    %1549 = vmatprep.subr.mxu0 0.0
    %1550 = vmatpush2.msra.mxu0 0.0
    %1551 = vmatprep.subr.mxu0 0.0
    %1552 = vmatpush2.msra.mxu0 0.0
    %1553 = vmatprep.subr.mxu0 0.0
    %1554 = vmatpush2.msra.mxu0 0.0
    %1555 = vmatprep.subr.mxu0 0.0
    %1556 = vmatpush2.msra.mxu0 0.0
    %1557 = vmatprep.subr.mxu0 0.0
    %1558 = vmatpush2.msra.mxu0 0.0
    %1559 = vmatprep.subr.mxu0 0.0
    %1560 = vmatpush2.msra.mxu0 0.0
    %1561 = vmatprep.subr.mxu0 0.0
    %1562 = vmatpush2.msra.mxu0 0.0
    %1563 = vmatprep.subr.mxu0 0.0
    %1564 = vmatpush2.msra.mxu0 0.0
    %1565 = vmatprep.subr.mxu0 0.0
    %1566 = vmatpush2.msra.mxu0 0.0
    %1567 = vmatprep.subr.mxu0 0.0
    %1568 = vmatpush2.msra.mxu0 0.0
    %1569 = vmatprep.mubr.f32.mxu0 0.0
    %1570 = vmatmul.mubr.f32.gmra.mxu0 %v1500
    %v1571 = vpop.f32.mrf.mxu0
    %v1572 = vadd.f32 %v1498, %v1571
    %v1573 = vpop.f32.mrf.mxu0
    %1574 = vmatprep.mubr.f32.mxu0 0.0
    %1575 = vmatmul.mubr.f32.gmra.mxu0 %v1503
    %v1576 = vpop.f32.mrf.mxu0
    %v1577 = vadd.f32 %v1498, %v1576
    %v1578 = vpop.f32.mrf.mxu0
    %1579 = vdwg.mxu0
    %v1580 = vadd.f32 %v33, %v1572
    %v1581 = vadd.f32 %v34, %v1577
    %v1582 = vsel %vm46, %v1580, 0.0
    %1583 = vadd.xlane.f32.xlu0 %v1582
    %v1584 = vpop.xlane.xlu0 %1583
    %v1585 = vsel %vm46, %v1581, 0.0
    %1586 = vadd.xlane.f32.xlu0 %v1585
    %v1587 = vpop.xlane.xlu0 %1586
    %v1588 = vrcp.pop 32.0
    %v1589 = vmul.f32 %v1584, %v1588
    %v1590 = vmul.f32 %v1587, %v1588
    %v1591 = vsub.f32 %v1580, %v1589
    %v1592 = vsub.f32 %v1581, %v1590
    %v1593 = vmul.f32 %v1591, %v1591
    %v1594 = vmul.f32 %v1592, %v1592
    %v1595 = vsel %vm46, %v1593, 0.0
    %1596 = vadd.xlane.f32.xlu0 %v1595
    %v1597 = vpop.xlane.xlu0 %1596
    %v1598 = vsel %vm46, %v1594, 0.0
    %1599 = vadd.xlane.f32.xlu0 %v1598
    %v1600 = vpop.xlane.xlu0 %1599
    %v1601 = vmul.f32 %v1597, %v1588
    %v1602 = vmul.f32 %v1600, %v1588
    %v1603 = vadd.f32 %v1601, 1e-06
    %v1604 = vadd.f32 %v1602, 1e-06
    %v1605 = vrsqrt.pop %v1603
    %v1606 = vrsqrt.pop %v1604
    %v1607 = vmul.f32 %v1591, %v1605
    %v1608 = vmul.f32 %v1592, %v1606
    %v1609 = vlaneseq
    %v1610 = vshrl.u32 %v1609, 7
    %v1611 = vsub.s32 1, %v1610
    %v1612 = vrot.slane %v32, %v1611
    %v1613 = vmul.f32 %v1607, %v1612
    %v1614 = vmul.f32 %v1608, %v1612
    %v1615 = vlaneseq
    %v1616 = vshrl.u32 %v1615, 7
    %v1617 = vsub.s32 2, %v1616
    %v1618 = vrot.slane %v32, %v1617
    %v1619 = vadd.f32 %v1613, %v1618
    %v1620 = vadd.f32 %v1614, %v1618
    %v1621 = vld [vmem:[%s4] sm:$0xff]
    %v1622 = vld [vmem:[%s4 + $0x8] sm:$0xff]
    %v1623 = vld [vmem:[%s4 + $0x10] sm:$0xff]
    %v1624 = vld [vmem:[%s4 + $0x18] sm:$0xff]
    %v1625 = vld [vmem:[%s5] sm:$0x1]
    %v1627 = vlaneseq
    %v1628 = vshrl.u32 %v1627, 7
    %v1629 = vsub.s32 0, %v1628
    %v1630 = vrot.slane %v1625, %v1629
    %v1633 = vsel %vm46, %v1619, 0
    %v1636 = vsel %vm46, %v1620, 0
    %1638 = vmatprep.subr.mxu0 0.0
    %1639 = vmatpush1.msra.mxu0 0.0
    %1640 = vmatprep.subr.mxu0 0.0
    %1641 = vmatpush1.msra.mxu0 0.0
    %1642 = vmatprep.subr.mxu0 0.0
    %1643 = vmatpush1.msra.mxu0 0.0
    %1644 = vmatprep.subr.mxu0 0.0
    %1645 = vmatpush1.msra.mxu0 0.0
    %1646 = vmatprep.subr.mxu0 0.0
    %1647 = vmatpush1.msra.mxu0 0.0
    %1648 = vmatprep.subr.mxu0 0.0
    %1649 = vmatpush1.msra.mxu0 0.0
    %1650 = vmatprep.subr.mxu0 0.0
    %1651 = vmatpush1.msra.mxu0 0.0
    %1652 = vmatprep.subr.mxu0 0.0
    %1653 = vmatpush1.msra.mxu0 0.0
    %1654 = vmatprep.subr.mxu0 0.0
    %1655 = vmatpush1.msra.mxu0 0.0
    %1656 = vmatprep.subr.mxu0 0.0
    %1657 = vmatpush1.msra.mxu0 0.0
    %1658 = vmatprep.subr.mxu0 0.0
    %1659 = vmatpush1.msra.mxu0 0.0
    %1660 = vmatprep.subr.mxu0 0.0
    %1661 = vmatpush1.msra.mxu0 0.0
    %1662 = vmatprep.subr.mxu0 0.0
    %1663 = vmatpush1.msra.mxu0 %v1624
    %1664 = vmatprep.subr.mxu0 0.0
    %1665 = vmatpush1.msra.mxu0 %v1623
    %1666 = vmatprep.subr.mxu0 0.0
    %1667 = vmatpush1.msra.mxu0 %v1622
    %1668 = vmatprep.subr.mxu0 0.0
    %1669 = vmatpush1.msra.mxu0 %v1621
    %1670 = vmatprep.subr.mxu0 0.0
    %1671 = vmatpush2.msra.mxu0 0.0
    %1672 = vmatprep.subr.mxu0 0.0
    %1673 = vmatpush2.msra.mxu0 0.0
    %1674 = vmatprep.subr.mxu0 0.0
    %1675 = vmatpush2.msra.mxu0 0.0
    %1676 = vmatprep.subr.mxu0 0.0
    %1677 = vmatpush2.msra.mxu0 0.0
    %1678 = vmatprep.subr.mxu0 0.0
    %1679 = vmatpush2.msra.mxu0 0.0
    %1680 = vmatprep.subr.mxu0 0.0
    %1681 = vmatpush2.msra.mxu0 0.0
    %1682 = vmatprep.subr.mxu0 0.0
    %1683 = vmatpush2.msra.mxu0 0.0
    %1684 = vmatprep.subr.mxu0 0.0
    %1685 = vmatpush2.msra.mxu0 0.0
    %1686 = vmatprep.subr.mxu0 0.0
    %1687 = vmatpush2.msra.mxu0 0.0
    %1688 = vmatprep.subr.mxu0 0.0
    %1689 = vmatpush2.msra.mxu0 0.0
    %1690 = vmatprep.subr.mxu0 0.0
    %1691 = vmatpush2.msra.mxu0 0.0
    %1692 = vmatprep.subr.mxu0 0.0
    %1693 = vmatpush2.msra.mxu0 0.0
    %1694 = vmatprep.subr.mxu0 0.0
    %1695 = vmatpush2.msra.mxu0 0.0
    %1696 = vmatprep.subr.mxu0 0.0
    %1697 = vmatpush2.msra.mxu0 0.0
    %1698 = vmatprep.subr.mxu0 0.0
    %1699 = vmatpush2.msra.mxu0 0.0
    %1700 = vmatprep.subr.mxu0 0.0
    %1701 = vmatpush2.msra.mxu0 0.0
    %1702 = vmatprep.mubr.f32.mxu0 0.0
    %1703 = vmatmul.mubr.f32.gmra.mxu0 %v1633
    %v1704 = vpop.f32.mrf.mxu0
    %v1705 = vadd.f32 %v1630, %v1704
    %v1706 = vpop.f32.mrf.mxu0
    %1707 = vmatprep.mubr.f32.mxu0 0.0
    %1708 = vmatmul.mubr.f32.gmra.mxu0 %v1636
    %v1709 = vpop.f32.mrf.mxu0
    %v1710 = vadd.f32 %v1630, %v1709
    %v1711 = vpop.f32.mrf.mxu0
    %1712 = vdwg.mxu0
    %v1713 = vmax.f32 %v1705, 0.0
    %v1714 = vmax.f32 %v1710, 0.0
    %v1715 = vld [vmem:[%s6] sm:$0xff]
    %v1716 = vld [vmem:[%s6 + $0x8] sm:$0xff]
    %v1717 = vld [vmem:[%s6 + $0x10] sm:$0xff]
    %v1718 = vld [vmem:[%s6 + $0x18] sm:$0xff]
    %v1719 = vld [vmem:[%s6 + $0x20] sm:$0xff]
    %v1720 = vld [vmem:[%s6 + $0x28] sm:$0xff]
    %v1721 = vld [vmem:[%s6 + $0x30] sm:$0xff]
    %v1722 = vld [vmem:[%s6 + $0x38] sm:$0xff]
    %v1723 = vlaneseq
    %v1724 = vshrl.u32 %v1723, 7
    %v1725 = vsub.s32 3, %v1724
    %v1726 = vrot.slane %v32, %v1725
    %vm1727 = vcmask 523264
    %v1729 = vsel %vm1727, %v1713, 0
    %v1732 = vsel %vm1727, %v1714, 0
    %1734 = vmatprep.subr.mxu0 0.0
    %1735 = vmatpush1.msra.mxu0 0.0
    %1736 = vmatprep.subr.mxu0 0.0
    %1737 = vmatpush1.msra.mxu0 0.0
    %1738 = vmatprep.subr.mxu0 0.0
    %1739 = vmatpush1.msra.mxu0 0.0
    %1740 = vmatprep.subr.mxu0 0.0
    %1741 = vmatpush1.msra.mxu0 0.0
    %1742 = vmatprep.subr.mxu0 0.0
    %1743 = vmatpush1.msra.mxu0 0.0
    %1744 = vmatprep.subr.mxu0 0.0
    %1745 = vmatpush1.msra.mxu0 0.0
    %1746 = vmatprep.subr.mxu0 0.0
    %1747 = vmatpush1.msra.mxu0 0.0
    %1748 = vmatprep.subr.mxu0 0.0
    %1749 = vmatpush1.msra.mxu0 0.0
    %1750 = vmatprep.subr.mxu0 0.0
    %1751 = vmatpush1.msra.mxu0 %v1722
    %1752 = vmatprep.subr.mxu0 0.0
    %1753 = vmatpush1.msra.mxu0 %v1721
    %1754 = vmatprep.subr.mxu0 0.0
    %1755 = vmatpush1.msra.mxu0 %v1720
    %1756 = vmatprep.subr.mxu0 0.0
    %1757 = vmatpush1.msra.mxu0 %v1719
    %1758 = vmatprep.subr.mxu0 0.0
    %1759 = vmatpush1.msra.mxu0 %v1718
    %1760 = vmatprep.subr.mxu0 0.0
    %1761 = vmatpush1.msra.mxu0 %v1717
    %1762 = vmatprep.subr.mxu0 0.0
    %1763 = vmatpush1.msra.mxu0 %v1716
    %1764 = vmatprep.subr.mxu0 0.0
    %1765 = vmatpush1.msra.mxu0 %v1715
    %1766 = vmatprep.subr.mxu0 0.0
    %1767 = vmatpush2.msra.mxu0 0.0
    %1768 = vmatprep.subr.mxu0 0.0
    %1769 = vmatpush2.msra.mxu0 0.0
    %1770 = vmatprep.subr.mxu0 0.0
    %1771 = vmatpush2.msra.mxu0 0.0
    %1772 = vmatprep.subr.mxu0 0.0
    %1773 = vmatpush2.msra.mxu0 0.0
    %1774 = vmatprep.subr.mxu0 0.0
    %1775 = vmatpush2.msra.mxu0 0.0
    %1776 = vmatprep.subr.mxu0 0.0
    %1777 = vmatpush2.msra.mxu0 0.0
    %1778 = vmatprep.subr.mxu0 0.0
    %1779 = vmatpush2.msra.mxu0 0.0
    %1780 = vmatprep.subr.mxu0 0.0
    %1781 = vmatpush2.msra.mxu0 0.0
    %1782 = vmatprep.subr.mxu0 0.0
    %1783 = vmatpush2.msra.mxu0 0.0
    %1784 = vmatprep.subr.mxu0 0.0
    %1785 = vmatpush2.msra.mxu0 0.0
    %1786 = vmatprep.subr.mxu0 0.0
    %1787 = vmatpush2.msra.mxu0 0.0
    %1788 = vmatprep.subr.mxu0 0.0
    %1789 = vmatpush2.msra.mxu0 0.0
    %1790 = vmatprep.subr.mxu0 0.0
    %1791 = vmatpush2.msra.mxu0 0.0
    %1792 = vmatprep.subr.mxu0 0.0
    %1793 = vmatpush2.msra.mxu0 0.0
    %1794 = vmatprep.subr.mxu0 0.0
    %1795 = vmatpush2.msra.mxu0 0.0
    %1796 = vmatprep.subr.mxu0 0.0
    %1797 = vmatpush2.msra.mxu0 0.0
    %1798 = vmatprep.mubr.f32.mxu0 0.0
    %1799 = vmatmul.mubr.f32.gmra.mxu0 %v1729
    %v1800 = vpop.f32.mrf.mxu0
    %v1801 = vadd.f32 %v1726, %v1800
    %v1802 = vpop.f32.mrf.mxu0
    %1803 = vmatprep.mubr.f32.mxu0 0.0
    %1804 = vmatmul.mubr.f32.gmra.mxu0 %v1732
    %v1805 = vpop.f32.mrf.mxu0
    %v1806 = vadd.f32 %v1726, %v1805
    %v1807 = vpop.f32.mrf.mxu0
    %1808 = vdwg.mxu0
    %v1809 = vadd.f32 %v1801, %v1619
    %v1810 = vadd.f32 %v1806, %v1620
    %v1811 = vsel %vm46, %v1809, 0.0
    %1812 = vadd.xlane.f32.xlu0 %v1811
    %v1813 = vpop.xlane.xlu0 %1812
    %v1814 = vsel %vm46, %v1810, 0.0
    %1815 = vadd.xlane.f32.xlu0 %v1814
    %v1816 = vpop.xlane.xlu0 %1815
    %v1817 = vmul.f32 %v1813, %v1588
    %v1818 = vmul.f32 %v1816, %v1588
    %v1819 = vsub.f32 %v1809, %v1817
    %v1820 = vsub.f32 %v1810, %v1818
    %v1821 = vmul.f32 %v1819, %v1819
    %v1822 = vmul.f32 %v1820, %v1820
    %v1823 = vsel %vm46, %v1821, 0.0
    %1824 = vadd.xlane.f32.xlu0 %v1823
    %v1825 = vpop.xlane.xlu0 %1824
    %v1826 = vsel %vm46, %v1822, 0.0
    %1827 = vadd.xlane.f32.xlu0 %v1826
    %v1828 = vpop.xlane.xlu0 %1827
    %v1829 = vmul.f32 %v1825, %v1588
    %v1830 = vmul.f32 %v1828, %v1588
    %v1831 = vadd.f32 %v1829, 1e-06
    %v1832 = vadd.f32 %v1830, 1e-06
    %v1833 = vrsqrt.pop %v1831
    %v1834 = vrsqrt.pop %v1832
    %v1835 = vmul.f32 %v1819, %v1833
    %v1836 = vmul.f32 %v1820, %v1834
    %v1837 = vlaneseq
    %v1838 = vshrl.u32 %v1837, 7
    %v1839 = vsub.s32 4, %v1838
    %v1840 = vrot.slane %v32, %v1839
    %v1841 = vmul.f32 %v1835, %v1840
    %v1842 = vmul.f32 %v1836, %v1840
    %v1843 = vlaneseq
    %v1844 = vshrl.u32 %v1843, 7
    %v1845 = vsub.s32 5, %v1844
    %v1846 = vrot.slane %v32, %v1845
    %v1847 = vadd.f32 %v1841, %v1846
    %v1848 = vadd.f32 %v1842, %v1846
    %1849 = vst.msk [vmem:[%s8] sm:$0xff] %vm46, %v1847
    %1850 = vst.msk [vmem:[%s8 + $0x8] sm:$0xff] %vm46, %v1848
    // Predicated region
    $region34: #{encoder_layer.1} parent=1 // pred_check
      _
    $region35: #{encoder_layer.1} parent=1 // pred_check_branch
      %1852 = sbr.rel (0) target = $region37
    $region36: #{encoder_layer.1} parent=1 // pred_region
      _
    $region37: #{encoder_layer.1} parent=1 // pred_fallthru
      _
    // Predicated region
    $region38: #{encoder_layer.1} parent=1 // pred_check
      _
    $region39: #{encoder_layer.1} parent=1 // pred_check_branch
      %1854 = sbr.rel (0) target = $region41
    $region40: #{encoder_layer.1} parent=1 // pred_region
      %s1856 = ssub.s32 256, 256
      %1857 = vsyncadd [#allocation3], %s1856
      %s1858 = sshll.u32 [#allocation2], 4
      %s1859 = int_to_ptr.vmem [resolvable:$true] %s1858
      %1864 = dma.vmem_to_hbm [thread:$0]  %s1859, 256, %s9, [#allocation3], 128, 128, 8
    $region41: #{encoder_layer.1} parent=1 // pred_fallthru
      _
    // Predicated region
    $region42: #{encoder_layer.1} parent=1 // pred_check
      _
    $region43: #{encoder_layer.1} parent=1 // pred_check_branch
      %1866 = sbr.rel (0) target = $region45
    $region44: #{encoder_layer.1} parent=1 // pred_region
      _
    $region45: #{encoder_layer.1} parent=1 // pred_fallthru
      _
    // Predicated region
    $region46: #{encoder_layer.1} parent=1 // pred_check
      _
    $region47: #{encoder_layer.1} parent=1 // pred_check_branch
      %1868 = sbr.rel (0) target = $region49
    $region48: #{encoder_layer.1} parent=1 // pred_region
      %1869 = dma.done [#allocation3], 256
    $region49: #{encoder_layer.1} parent=1 // pred_fallthru
      _
    %1870 = vsyncpa [#allocation3], 1

</llo_original>
